<compile_context>
chip_gen: v7x
topology: tpu7x:2x2x1
jax: 0.10.0
libtpu: 0.0.40
codegen_flags: <defaults>
</compile_context>

<pallas_src>
import functools

import jax
import jax.numpy as jnp
from jax import lax
from jax.experimental import pallas as pl
from jax.experimental.pallas import tpu as pltpu


def _round_up(x, m):
    return ((x + m - 1) // m) * m


def _cdiv(a, b):
    return -(-a // b)


def _vmem_capacity_bytes():
    """Physical VMEM capacity of the local TPU, with a conservative fallback."""
    try:
        info = pltpu.get_tpu_info()
        for attr in ("vmem_capacity_bytes", "vmem_bytes", "vmem_size_bytes"):
            v = getattr(info, attr, None)
            if v:
                return int(v)
    except Exception:
        pass
    return 64 * 1024 * 1024  # safe for every generation (v7x has 64 MiB / TC)


def _calstm_kernel(x_ref, w_ref, b_ref, hs_ref, cs_ref,
                   xp_ref, hprev_ref, cprev_ref, *, unroll, matmul_dtype):
    """Process TT timesteps of the CALSTM recurrence for one batch tile.

    x_ref  : (TT, TB, Hp)   h_lower block (time-major)
    w_ref  : (2, Hp, 4Hp)   [0]=Wl (applied to h_lower), [1]=Wp (applied to h_prev)
    b_ref  : (1, 4Hp)       bias with "+1" pre-folded into the f_prev columns
    hs_ref, cs_ref : (TT, TB, Hp) per-timestep outputs
    xp_ref : (TT, TB, 4Hp)  VMEM scratch for the hoisted input projection
    hprev_ref, cprev_ref : (TB, Hp) VMEM scratch carrying state across time blocks
    """
    t_blk = pl.program_id(1)

    @pl.when(t_blk == 0)
    def _():
        hprev_ref[...] = jnp.zeros_like(hprev_ref)
        cprev_ref[...] = jnp.zeros_like(cprev_ref)

    TT, TB, Hp = x_ref.shape

    # Fused, hoisted input projection for the whole time block (off the serial
    # per-step path): one MXU matmul + one bias add per grid step.
    x2d = x_ref[...].reshape(TT * TB, Hp).astype(matmul_dtype)
    wl = w_ref[0].astype(matmul_dtype)
    xp = jnp.dot(x2d, wl, preferred_element_type=jnp.float32) + b_ref[...]
    xp_ref[...] = xp.reshape(TT, TB, 4 * Hp)

    wp = w_ref[1].astype(matmul_dtype)  # resident recurrent weight

    def step(s, carry):
        h_prev, c_prev = carry
        # gates = precomputed input part + recurrent part (serial chain)
        g = xp_ref[s] + jnp.dot(h_prev.astype(matmul_dtype), wp,
                                preferred_element_type=jnp.float32)
        i_g = g[:, 0 * Hp:1 * Hp]
        f_g = g[:, 1 * Hp:2 * Hp]   # "+1" already folded into the bias
        u_g = g[:, 2 * Hp:3 * Hp]
        o_g = g[:, 3 * Hp:4 * Hp]
        # lam = 1.0 (fuse_type=False): c_lower branch is exactly zero -> dropped.
        c = c_prev * jax.nn.sigmoid(f_g) + jnp.tanh(u_g) * jax.nn.sigmoid(i_g)
        h = jax.nn.sigmoid(o_g) * jnp.tanh(c)
        hs_ref[s] = h.astype(hs_ref.dtype)
        cs_ref[s] = c.astype(cs_ref.dtype)
        return (h, c)

    carry = (hprev_ref[...], cprev_ref[...])
    carry = lax.fori_loop(0, TT, step, carry, unroll=unroll)
    hprev_ref[...] = carry[0]
    cprev_ref[...] = carry[1]


def calstm_forward(h_seq, c_seq, W, b, *, time_block=32, matmul_dtype=jnp.float32):
    """CALSTM.forward with hx=None, length=None, fuse_type=False.

    h_seq, c_seq : (B, T, H) float32 (PyTorch layout)
    W            : (5H, 2H) float32 (nn.Linear weight of Linear(2H -> 5H))
    b            : (5H,)    float32
    Returns ((hs, cs), (h_T, c_T)) with hs, cs of shape (B, T, H).
    """
    B, T, H = h_seq.shape
    assert W.shape == (5 * H, 2 * H) and b.shape == (5 * H,)
    del c_seq  # lam = 1.0 => the c_lower branch contributes exactly zero.

    Hp = _round_up(H, 128)  # lane-aligned gates / lane-dense stores

    # --- weights: keep only live gates (i, f_prev, u, o), pad to Hp ----------
    Wt = W.astype(jnp.float32).T  # (2H, 5H), gate order [i, f_prev, f_lower, u, o]

    def gate_cols(w_half):  # (H, 5H) -> (Hp, 4Hp)
        gs = [w_half[:, 0 * H:1 * H], w_half[:, 1 * H:2 * H],
              w_half[:, 3 * H:4 * H], w_half[:, 4 * H:5 * H]]
        return jnp.concatenate(
            [jnp.pad(g, ((0, Hp - H), (0, Hp - H))) for g in gs], axis=1)

    W2 = jnp.stack([gate_cols(Wt[:H]), gate_cols(Wt[H:])], axis=0)  # (2, Hp, 4Hp)

    bf = b.astype(jnp.float32)
    b_gates = [bf[0 * H:1 * H], bf[1 * H:2 * H] + 1.0,  # fold forget "+1" here
               bf[3 * H:4 * H], bf[4 * H:5 * H]]
    b4 = jnp.concatenate([jnp.pad(x, (0, Hp - H)) for x in b_gates])
    b4 = b4.reshape(1, 4 * Hp)

    # --- tile selection (batch, time) driven by VMEM capacity ---------------
    B8 = _round_up(B, 8)
    if B8 <= 8:
        TB = B8
    else:
        # >= 2 batch blocks so the "parallel" axis can shard across v7x's 2 TCs;
        # cap block rows at 256 (v6e/v7x MXU M-dim).
        nb = max(2, _cdiv(B8, 256))
        TB = _round_up(_cdiv(B8, nb), 8)
    TT = max(1, min(time_block, T))

    cap = _vmem_capacity_bytes()
    vmem_limit = max(32 * 1024 * 1024, int(cap * 0.8))
    budget = int(vmem_limit * 0.85)  # headroom for compiler temporaries

    def est_bytes(tt, tb):
        blk = tt * tb * Hp * 4
        return (6 * blk                       # x (2 buf) + hs, cs (2 buf each)
                + tt * tb * 4 * Hp * 4        # xp scratch
                + 2 * 2 * Hp * 4 * Hp * 4     # weights, double-buffered
                + 2 * tb * Hp * 4             # h / c carries
                + 2 * 4 * Hp * 4)             # bias

    while est_bytes(TT, TB) > budget and TT > 1:
        TT = max(1, TT // 2)
    while est_bytes(TT, TB) > budget and TB > 8:
        TB = max(8, _round_up(TB // 2, 8))
    vmem_limit = int(min(cap, max(vmem_limit, int(est_bytes(TT, TB) * 1.15))))

    B_pad = _round_up(B8, TB)
    T_pad = _round_up(T, TT)

    # Padded trailing timesteps compute garbage that is sliced off below; the
    # recurrence is causal so they never affect real outputs (final states are
    # taken from hs[:, T-1], not from the scratch carry).
    h_tm = jnp.transpose(h_seq.astype(jnp.float32), (1, 0, 2))      # (T, B, H)
    h_tm = jnp.pad(h_tm, ((0, T_pad - T), (0, B_pad - B), (0, Hp - H)))

    grid = (B_pad // TB, T_pad // TT)

    grid_spec = pltpu.PrefetchScalarGridSpec(
        num_scalar_prefetch=0,
        grid=grid,
        in_specs=[
            pl.BlockSpec((TT, TB, Hp), lambda bb, tt: (tt, bb, 0)),     # h_lower
            pl.BlockSpec((2, Hp, 4 * Hp), lambda bb, tt: (0, 0, 0)),    # weights
            pl.BlockSpec((1, 4 * Hp), lambda bb, tt: (0, 0)),           # bias
        ],
        out_specs=[
            pl.BlockSpec((TT, TB, Hp), lambda bb, tt: (tt, bb, 0)),     # hs
            pl.BlockSpec((TT, TB, Hp), lambda bb, tt: (tt, bb, 0)),     # cs
        ],
        scratch_shapes=[
            pltpu.VMEM((TT, TB, 4 * Hp), jnp.float32),   # hoisted projection
            pltpu.VMEM((TB, Hp), jnp.float32),           # h carry
            pltpu.VMEM((TB, Hp), jnp.float32),           # c carry
        ],
    )

    kernel = functools.partial(_calstm_kernel,
                               unroll=min(TT, 4),
                               matmul_dtype=matmul_dtype)

    hs_tm, cs_tm = pl.pallas_call(
        kernel,
        out_shape=(jax.ShapeDtypeStruct((T_pad, B_pad, Hp), jnp.float32),
                   jax.ShapeDtypeStruct((T_pad, B_pad, Hp), jnp.float32)),
        grid_spec=grid_spec,
        compiler_params=pltpu.CompilerParams(
            dimension_semantics=("parallel", "arbitrary"),  # batch ||, time serial
            vmem_limit_bytes=vmem_limit),
    )(h_tm, W2, b4)

    hs = jnp.transpose(hs_tm[:T, :B, :H], (1, 0, 2))   # (B, T, H)
    cs = jnp.transpose(cs_tm[:T, :B, :H], (1, 0, 2))
    hx = (hs[:, -1], cs[:, -1])
    return (hs, cs), hx


def calstm_reference(h_seq, c_seq, W, b):
    """Pure-JAX reference mirroring the PyTorch code (fuse_type=False)."""
    B, T, H = h_seq.shape

    def step(carry, xt):
        h_prev, c_prev = carry
        h_l, c_l = xt
        x = jnp.concatenate([h_l, h_prev], axis=1)                    # (B, 2H)
        y = jnp.dot(x, W.T, precision=lax.Precision.HIGHEST) + b      # (B, 5H)
        i_g, f_prev, f_lower, u_g, o_g = jnp.split(y, 5, axis=1)
        lam = 1.0  # 1 - float(False)
        c = (lam * (c_prev * jax.nn.sigmoid(f_prev + 1.0))
             + (1.0 - lam) * (c_l * jax.nn.sigmoid(f_lower + 1.0))
             + jnp.tanh(u_g) * jax.nn.sigmoid(i_g))
        h = jax.nn.sigmoid(o_g) * jnp.tanh(c)
        return (h, c), (h, c)

    h0 = jnp.zeros((B, H), jnp.float32)
    c0 = jnp.zeros((B, H), jnp.float32)
    xs = (jnp.transpose(h_seq, (1, 0, 2)), jnp.transpose(c_seq, (1, 0, 2)))
    (hT, cT), (hs_tm, cs_tm) = lax.scan(step, (h0, c0), xs)
    hs = jnp.transpose(hs_tm, (1, 0, 2))
    cs = jnp.transpose(cs_tm, (1, 0, 2))
    return (hs, cs), (hT, cT)


def _run_case(B, T, H, time_block):
    key = jax.random.PRNGKey(0)
    k_h, k_c, k_w, k_b = jax.random.split(key, 4)

    h_seq = jax.random.normal(k_h, (B, T, H), dtype=jnp.float32)
    c_seq = jax.random.normal(k_c, (B, T, H), dtype=jnp.float32)
    # Deterministic parameters for Linear(2H -> 5H); a non-zero bias exercises
    # the bias-folding path.
    W = jax.random.normal(k_w, (5 * H, 2 * H), dtype=jnp.float32) / jnp.sqrt(2.0 * H)
    b = 0.1 * jax.random.normal(k_b, (5 * H,), dtype=jnp.float32)

    (hs, cs), (h_last, c_last) = calstm_forward(h_seq, c_seq, W, b,
                                                time_block=time_block)
    jax.block_until_ready((hs, cs, h_last, c_last))

    (hs_r, cs_r), (h_last_r, c_last_r) = calstm_reference(h_seq, c_seq, W, b)
    assert jnp.allclose(hs, hs_r, atol=1e-4, rtol=1e-4), "hs mismatch"
    assert jnp.allclose(cs, cs_r, atol=1e-4, rtol=1e-4), "cs mismatch"
    assert jnp.allclose(h_last, h_last_r, atol=1e-4, rtol=1e-4), "h_last mismatch"
    assert jnp.allclose(c_last, c_last_r, atol=1e-4, rtol=1e-4), "c_last mismatch"


if __name__ == "__main__":
    # Case 1: module-sized shapes; small time_block exercises the time-block
    # carry (grid = (1, 2)).
    _run_case(B=2, T=8, H=32, time_block=4)
    # Case 2: odd B/T/H exercise the batch / time / lane padding paths.
    _run_case(B=5, T=7, H=20, time_block=32)
    print("KERNEL_OK")
</pallas_src>

<mosaic_0001>
module attributes {stable_mosaic.version = 11 : i64} {
  func.func @_calstm_kernel(%arg0: i32, %arg1: i32, %arg2: memref<4x8x128xf32, #tpu.memory_space<vmem>>, %arg3: memref<2x128x512xf32, #tpu.memory_space<vmem>>, %arg4: memref<1x512xf32, #tpu.memory_space<vmem>>, %arg5: memref<4x8x128xf32, #tpu.memory_space<vmem>>, %arg6: memref<4x8x128xf32, #tpu.memory_space<vmem>>, %arg7: memref<4x8x512xf32, #tpu.memory_space<vmem>>, %arg8: memref<8x128xf32, #tpu.memory_space<vmem>>, %arg9: memref<8x128xf32, #tpu.memory_space<vmem>>) attributes {dimension_semantics = [#tpu.dimension_semantics<parallel>, #tpu.dimension_semantics<arbitrary>], iteration_bounds = array<i64: 1, 2>, scalar_prefetch = 0 : i64, scratch_operands = 3 : i64, tpu.core_type = #tpu.core_type<tc>, window_params = [{transform_indices = @transform_0, window_bounds = array<i64: 4, 8, 128>}, {pipeline_mode = #tpu.pipeline_mode<synchronous>, transform_indices = @transform_1, window_bounds = array<i64: 2, 128, 512>}, {pipeline_mode = #tpu.pipeline_mode<synchronous>, transform_indices = @transform_2, window_bounds = array<i64: 1, 512>}, {transform_indices = @transform_3, window_bounds = array<i64: 4, 8, 128>}, {transform_indices = @transform_4, window_bounds = array<i64: 4, 8, 128>}]} {
    %c0_i32 = arith.constant 0 : i32
    %0 = arith.cmpi eq, %arg1, %c0_i32 : i32
    %1 = arith.extui %0 : i1 to i32
    %c0_i32_0 = arith.constant 0 : i32
    %2 = arith.cmpi ne, %1, %c0_i32_0 : i32
    scf.if %2 {
      %cst_62 = arith.constant 0.000000e+00 : f32
      %171 = vector.broadcast %cst_62 : f32 to vector<8x128xf32>
      %c0_63 = arith.constant 0 : index
      %c0_64 = arith.constant 0 : index
      %172 = vector.load %arg8[%c0_63, %c0_64] : memref<8x128xf32, #tpu.memory_space<vmem>>, vector<8x128xf32>
      tpu.vector_store %arg8[%c0_63, %c0_64], %171 {strides = array<i32>} : memref<8x128xf32, #tpu.memory_space<vmem>>, vector<8x128xf32>,
      %cst_65 = arith.constant 0.000000e+00 : f32
      %173 = vector.broadcast %cst_65 : f32 to vector<8x128xf32>
      %c0_66 = arith.constant 0 : index
      %c0_67 = arith.constant 0 : index
      %174 = vector.load %arg9[%c0_66, %c0_67] : memref<8x128xf32, #tpu.memory_space<vmem>>, vector<8x128xf32>
      tpu.vector_store %arg9[%c0_66, %c0_67], %173 {strides = array<i32>} : memref<8x128xf32, #tpu.memory_space<vmem>>, vector<8x128xf32>,
    } else {
    }
    %c0 = arith.constant 0 : index
    %c0_1 = arith.constant 0 : index
    %c0_2 = arith.constant 0 : index
    %3 = vector.load %arg2[%c0, %c0_1, %c0_2] : memref<4x8x128xf32, #tpu.memory_space<vmem>>, vector<4x8x128xf32>
    %4 = vector.shape_cast %3 : vector<4x8x128xf32> to vector<32x128xf32>
    %c0_3 = arith.constant 0 : index
    %c0_4 = arith.constant 0 : index
    %c0_5 = arith.constant 0 : index
    %5 = vector.load %arg3[%c0_3, %c0_4, %c0_5] : memref<2x128x512xf32, #tpu.memory_space<vmem>>, vector<1x128x512xf32>
    %6 = vector.shape_cast %5 : vector<1x128x512xf32> to vector<128x512xf32>
    %cst = arith.constant dense<0.000000e+00> : vector<32x512xf32>
    %7 = tpu.matmul %4, %6, %cst {dimension_numbers = #tpu.dot_dimension_numbers<[1], [0], [0], [1], [0, 0, 1, 1], [], []>} : vector<32x128xf32>, vector<128x512xf32>, vector<32x512xf32> -> vector<32x512xf32>
    %c0_6 = arith.constant 0 : index
    %c0_7 = arith.constant 0 : index
    %8 = vector.load %arg4[%c0_6, %c0_7] : memref<1x512xf32, #tpu.memory_space<vmem>>, vector<1x512xf32>
    %9 = vector.broadcast %8 : vector<1x512xf32> to vector<32x512xf32>
    %10 = arith.addf %7, %9 : vector<32x512xf32>
    %11 = vector.shape_cast %10 : vector<32x512xf32> to vector<4x8x512xf32>
    %c0_8 = arith.constant 0 : index
    %c0_9 = arith.constant 0 : index
    %c0_10 = arith.constant 0 : index
    %12 = vector.load %arg7[%c0_8, %c0_9, %c0_10] : memref<4x8x512xf32, #tpu.memory_space<vmem>>, vector<4x8x512xf32>
    tpu.vector_store %arg7[%c0_8, %c0_9, %c0_10], %11 {strides = array<i32>} : memref<4x8x512xf32, #tpu.memory_space<vmem>>, vector<4x8x512xf32>,
    %c1 = arith.constant 1 : index
    %c0_11 = arith.constant 0 : index
    %c0_12 = arith.constant 0 : index
    %13 = vector.load %arg3[%c1, %c0_11, %c0_12] : memref<2x128x512xf32, #tpu.memory_space<vmem>>, vector<1x128x512xf32>
    %14 = vector.shape_cast %13 : vector<1x128x512xf32> to vector<128x512xf32>
    %c0_13 = arith.constant 0 : index
    %c0_14 = arith.constant 0 : index
    %15 = vector.load %arg8[%c0_13, %c0_14] : memref<8x128xf32, #tpu.memory_space<vmem>>, vector<8x128xf32>
    %c0_15 = arith.constant 0 : index
    %c0_16 = arith.constant 0 : index
    %16 = vector.load %arg9[%c0_15, %c0_16] : memref<8x128xf32, #tpu.memory_space<vmem>>, vector<8x128xf32>
    %c0_i32_17 = arith.constant 0 : i32
    %17 = arith.index_cast %c0_i32_17 : i32 to index
    %c0_18 = arith.constant 0 : index
    %c0_19 = arith.constant 0 : index
    %18 = vector.load %arg7[%17, %c0_18, %c0_19] : memref<4x8x512xf32, #tpu.memory_space<vmem>>, vector<1x8x512xf32>
    %19 = vector.shape_cast %18 : vector<1x8x512xf32> to vector<8x512xf32>
    %cst_20 = arith.constant dense<0.000000e+00> : vector<8x512xf32>
    %20 = tpu.matmul %15, %14, %cst_20 {dimension_numbers = #tpu.dot_dimension_numbers<[1], [0], [0], [1], [0, 0, 1, 1], [], []>} : vector<8x128xf32>, vector<128x512xf32>, vector<8x512xf32> -> vector<8x512xf32>
    %21 = arith.addf %19, %20 : vector<8x512xf32>
    %22 = vector.extract_strided_slice %21 {offsets = [0, 0], sizes = [8, 128], strides = [1, 1]} : vector<8x512xf32> to vector<8x128xf32>
    %23 = vector.extract_strided_slice %21 {offsets = [0, 128], sizes = [8, 128], strides = [1, 1]} : vector<8x512xf32> to vector<8x128xf32>
    %24 = vector.extract_strided_slice %21 {offsets = [0, 256], sizes = [8, 128], strides = [1, 1]} : vector<8x512xf32> to vector<8x128xf32>
    %25 = vector.extract_strided_slice %21 {offsets = [0, 384], sizes = [8, 128], strides = [1, 1]} : vector<8x512xf32> to vector<8x128xf32>
    %26 = arith.negf %23 : vector<8x128xf32>
    %27 = math.exp %26 : vector<8x128xf32>
    %cst_21 = arith.constant 1.000000e+00 : f32
    %28 = vector.broadcast %cst_21 : f32 to vector<8x128xf32>
    %29 = arith.addf %28, %27 : vector<8x128xf32>
    %30 = arith.divf %28, %29 : vector<8x128xf32>
    %31 = arith.mulf %16, %30 : vector<8x128xf32>
    %32 = math.tanh %24 : vector<8x128xf32>
    %33 = arith.negf %22 : vector<8x128xf32>
    %34 = math.exp %33 : vector<8x128xf32>
    %cst_22 = arith.constant 1.000000e+00 : f32
    %35 = vector.broadcast %cst_22 : f32 to vector<8x128xf32>
    %36 = arith.addf %35, %34 : vector<8x128xf32>
    %37 = arith.divf %35, %36 : vector<8x128xf32>
    %38 = arith.mulf %32, %37 : vector<8x128xf32>
    %39 = arith.addf %31, %38 : vector<8x128xf32>
    %40 = arith.negf %25 : vector<8x128xf32>
    %41 = math.exp %40 : vector<8x128xf32>
    %cst_23 = arith.constant 1.000000e+00 : f32
    %42 = vector.broadcast %cst_23 : f32 to vector<8x128xf32>
    %43 = arith.addf %42, %41 : vector<8x128xf32>
    %44 = arith.divf %42, %43 : vector<8x128xf32>
    %45 = math.tanh %39 : vector<8x128xf32>
    %46 = arith.mulf %44, %45 : vector<8x128xf32>
    %47 = arith.index_cast %c0_i32_17 : i32 to index
    %c0_24 = arith.constant 0 : index
    %c0_25 = arith.constant 0 : index
    %48 = vector.load %arg5[%47, %c0_24, %c0_25] : memref<4x8x128xf32, #tpu.memory_space<vmem>>, vector<1x8x128xf32>
    %49 = vector.shape_cast %48 : vector<1x8x128xf32> to vector<8x128xf32>
    %50 = vector.shape_cast %46 : vector<8x128xf32> to vector<1x8x128xf32>
    tpu.vector_store %arg5[%47, %c0_24, %c0_25], %50 {strides = array<i32>} : memref<4x8x128xf32, #tpu.memory_space<vmem>>, vector<1x8x128xf32>,
    %51 = arith.index_cast %c0_i32_17 : i32 to index
    %c0_26 = arith.constant 0 : index
    %c0_27 = arith.constant 0 : index
    %52 = vector.load %arg6[%51, %c0_26, %c0_27] : memref<4x8x128xf32, #tpu.memory_space<vmem>>, vector<1x8x128xf32>
    %53 = vector.shape_cast %52 : vector<1x8x128xf32> to vector<8x128xf32>
    %54 = vector.shape_cast %39 : vector<8x128xf32> to vector<1x8x128xf32>
    tpu.vector_store %arg6[%51, %c0_26, %c0_27], %54 {strides = array<i32>} : memref<4x8x128xf32, #tpu.memory_space<vmem>>, vector<1x8x128xf32>,
    %c1_i32 = arith.constant 1 : i32
    %55 = arith.index_cast %c1_i32 : i32 to index
    %c0_28 = arith.constant 0 : index
    %c0_29 = arith.constant 0 : index
    %56 = vector.load %arg7[%55, %c0_28, %c0_29] : memref<4x8x512xf32, #tpu.memory_space<vmem>>, vector<1x8x512xf32>
    %57 = vector.shape_cast %56 : vector<1x8x512xf32> to vector<8x512xf32>
    %cst_30 = arith.constant dense<0.000000e+00> : vector<8x512xf32>
    %58 = tpu.matmul %46, %14, %cst_30 {dimension_numbers = #tpu.dot_dimension_numbers<[1], [0], [0], [1], [0, 0, 1, 1], [], []>} : vector<8x128xf32>, vector<128x512xf32>, vector<8x512xf32> -> vector<8x512xf32>
    %59 = arith.addf %57, %58 : vector<8x512xf32>
    %60 = vector.extract_strided_slice %59 {offsets = [0, 0], sizes = [8, 128], strides = [1, 1]} : vector<8x512xf32> to vector<8x128xf32>
    %61 = vector.extract_strided_slice %59 {offsets = [0, 128], sizes = [8, 128], strides = [1, 1]} : vector<8x512xf32> to vector<8x128xf32>
    %62 = vector.extract_strided_slice %59 {offsets = [0, 256], sizes = [8, 128], strides = [1, 1]} : vector<8x512xf32> to vector<8x128xf32>
    %63 = vector.extract_strided_slice %59 {offsets = [0, 384], sizes = [8, 128], strides = [1, 1]} : vector<8x512xf32> to vector<8x128xf32>
    %64 = arith.negf %61 : vector<8x128xf32>
    %65 = math.exp %64 : vector<8x128xf32>
    %cst_31 = arith.constant 1.000000e+00 : f32
    %66 = vector.broadcast %cst_31 : f32 to vector<8x128xf32>
    %67 = arith.addf %66, %65 : vector<8x128xf32>
    %68 = arith.divf %66, %67 : vector<8x128xf32>
    %69 = arith.mulf %39, %68 : vector<8x128xf32>
    %70 = math.tanh %62 : vector<8x128xf32>
    %71 = arith.negf %60 : vector<8x128xf32>
    %72 = math.exp %71 : vector<8x128xf32>
    %cst_32 = arith.constant 1.000000e+00 : f32
    %73 = vector.broadcast %cst_32 : f32 to vector<8x128xf32>
    %74 = arith.addf %73, %72 : vector<8x128xf32>
    %75 = arith.divf %73, %74 : vector<8x128xf32>
    %76 = arith.mulf %70, %75 : vector<8x128xf32>
    %77 = arith.addf %69, %76 : vector<8x128xf32>
    %78 = arith.negf %63 : vector<8x128xf32>
    %79 = math.exp %78 : vector<8x128xf32>
    %cst_33 = arith.constant 1.000000e+00 : f32
    %80 = vector.broadcast %cst_33 : f32 to vector<8x128xf32>
    %81 = arith.addf %80, %79 : vector<8x128xf32>
    %82 = arith.divf %80, %81 : vector<8x128xf32>
    %83 = math.tanh %77 : vector<8x128xf32>
    %84 = arith.mulf %82, %83 : vector<8x128xf32>
    %85 = arith.index_cast %c1_i32 : i32 to index
    %c0_34 = arith.constant 0 : index
    %c0_35 = arith.constant 0 : index
    %86 = vector.load %arg5[%85, %c0_34, %c0_35] : memref<4x8x128xf32, #tpu.memory_space<vmem>>, vector<1x8x128xf32>
    %87 = vector.shape_cast %86 : vector<1x8x128xf32> to vector<8x128xf32>
    %88 = vector.shape_cast %84 : vector<8x128xf32> to vector<1x8x128xf32>
    tpu.vector_store %arg5[%85, %c0_34, %c0_35], %88 {strides = array<i32>} : memref<4x8x128xf32, #tpu.memory_space<vmem>>, vector<1x8x128xf32>,
    %89 = arith.index_cast %c1_i32 : i32 to index
    %c0_36 = arith.constant 0 : index
    %c0_37 = arith.constant 0 : index
    %90 = vector.load %arg6[%89, %c0_36, %c0_37] : memref<4x8x128xf32, #tpu.memory_space<vmem>>, vector<1x8x128xf32>
    %91 = vector.shape_cast %90 : vector<1x8x128xf32> to vector<8x128xf32>
    %92 = vector.shape_cast %77 : vector<8x128xf32> to vector<1x8x128xf32>
    tpu.vector_store %arg6[%89, %c0_36, %c0_37], %92 {strides = array<i32>} : memref<4x8x128xf32, #tpu.memory_space<vmem>>, vector<1x8x128xf32>,
    %c2_i32 = arith.constant 2 : i32
    %93 = arith.index_cast %c2_i32 : i32 to index
    %c0_38 = arith.constant 0 : index
    %c0_39 = arith.constant 0 : index
    %94 = vector.load %arg7[%93, %c0_38, %c0_39] : memref<4x8x512xf32, #tpu.memory_space<vmem>>, vector<1x8x512xf32>
    %95 = vector.shape_cast %94 : vector<1x8x512xf32> to vector<8x512xf32>
    %cst_40 = arith.constant dense<0.000000e+00> : vector<8x512xf32>
    %96 = tpu.matmul %84, %14, %cst_40 {dimension_numbers = #tpu.dot_dimension_numbers<[1], [0], [0], [1], [0, 0, 1, 1], [], []>} : vector<8x128xf32>, vector<128x512xf32>, vector<8x512xf32> -> vector<8x512xf32>
    %97 = arith.addf %95, %96 : vector<8x512xf32>
    %98 = vector.extract_strided_slice %97 {offsets = [0, 0], sizes = [8, 128], strides = [1, 1]} : vector<8x512xf32> to vector<8x128xf32>
    %99 = vector.extract_strided_slice %97 {offsets = [0, 128], sizes = [8, 128], strides = [1, 1]} : vector<8x512xf32> to vector<8x128xf32>
    %100 = vector.extract_strided_slice %97 {offsets = [0, 256], sizes = [8, 128], strides = [1, 1]} : vector<8x512xf32> to vector<8x128xf32>
    %101 = vector.extract_strided_slice %97 {offsets = [0, 384], sizes = [8, 128], strides = [1, 1]} : vector<8x512xf32> to vector<8x128xf32>
    %102 = arith.negf %99 : vector<8x128xf32>
    %103 = math.exp %102 : vector<8x128xf32>
    %cst_41 = arith.constant 1.000000e+00 : f32
    %104 = vector.broadcast %cst_41 : f32 to vector<8x128xf32>
    %105 = arith.addf %104, %103 : vector<8x128xf32>
    %106 = arith.divf %104, %105 : vector<8x128xf32>
    %107 = arith.mulf %77, %106 : vector<8x128xf32>
    %108 = math.tanh %100 : vector<8x128xf32>
    %109 = arith.negf %98 : vector<8x128xf32>
    %110 = math.exp %109 : vector<8x128xf32>
    %cst_42 = arith.constant 1.000000e+00 : f32
    %111 = vector.broadcast %cst_42 : f32 to vector<8x128xf32>
    %112 = arith.addf %111, %110 : vector<8x128xf32>
    %113 = arith.divf %111, %112 : vector<8x128xf32>
    %114 = arith.mulf %108, %113 : vector<8x128xf32>
    %115 = arith.addf %107, %114 : vector<8x128xf32>
    %116 = arith.negf %101 : vector<8x128xf32>
    %117 = math.exp %116 : vector<8x128xf32>
    %cst_43 = arith.constant 1.000000e+00 : f32
    %118 = vector.broadcast %cst_43 : f32 to vector<8x128xf32>
    %119 = arith.addf %118, %117 : vector<8x128xf32>
    %120 = arith.divf %118, %119 : vector<8x128xf32>
    %121 = math.tanh %115 : vector<8x128xf32>
    %122 = arith.mulf %120, %121 : vector<8x128xf32>
    %123 = arith.index_cast %c2_i32 : i32 to index
    %c0_44 = arith.constant 0 : index
    %c0_45 = arith.constant 0 : index
    %124 = vector.load %arg5[%123, %c0_44, %c0_45] : memref<4x8x128xf32, #tpu.memory_space<vmem>>, vector<1x8x128xf32>
    %125 = vector.shape_cast %124 : vector<1x8x128xf32> to vector<8x128xf32>
    %126 = vector.shape_cast %122 : vector<8x128xf32> to vector<1x8x128xf32>
    tpu.vector_store %arg5[%123, %c0_44, %c0_45], %126 {strides = array<i32>} : memref<4x8x128xf32, #tpu.memory_space<vmem>>, vector<1x8x128xf32>,
    %127 = arith.index_cast %c2_i32 : i32 to index
    %c0_46 = arith.constant 0 : index
    %c0_47 = arith.constant 0 : index
    %128 = vector.load %arg6[%127, %c0_46, %c0_47] : memref<4x8x128xf32, #tpu.memory_space<vmem>>, vector<1x8x128xf32>
    %129 = vector.shape_cast %128 : vector<1x8x128xf32> to vector<8x128xf32>
    %130 = vector.shape_cast %115 : vector<8x128xf32> to vector<1x8x128xf32>
    tpu.vector_store %arg6[%127, %c0_46, %c0_47], %130 {strides = array<i32>} : memref<4x8x128xf32, #tpu.memory_space<vmem>>, vector<1x8x128xf32>,
    %c3_i32 = arith.constant 3 : i32
    %131 = arith.index_cast %c3_i32 : i32 to index
    %c0_48 = arith.constant 0 : index
    %c0_49 = arith.constant 0 : index
    %132 = vector.load %arg7[%131, %c0_48, %c0_49] : memref<4x8x512xf32, #tpu.memory_space<vmem>>, vector<1x8x512xf32>
    %133 = vector.shape_cast %132 : vector<1x8x512xf32> to vector<8x512xf32>
    %cst_50 = arith.constant dense<0.000000e+00> : vector<8x512xf32>
    %134 = tpu.matmul %122, %14, %cst_50 {dimension_numbers = #tpu.dot_dimension_numbers<[1], [0], [0], [1], [0, 0, 1, 1], [], []>} : vector<8x128xf32>, vector<128x512xf32>, vector<8x512xf32> -> vector<8x512xf32>
    %135 = arith.addf %133, %134 : vector<8x512xf32>
    %136 = vector.extract_strided_slice %135 {offsets = [0, 0], sizes = [8, 128], strides = [1, 1]} : vector<8x512xf32> to vector<8x128xf32>
    %137 = vector.extract_strided_slice %135 {offsets = [0, 128], sizes = [8, 128], strides = [1, 1]} : vector<8x512xf32> to vector<8x128xf32>
    %138 = vector.extract_strided_slice %135 {offsets = [0, 256], sizes = [8, 128], strides = [1, 1]} : vector<8x512xf32> to vector<8x128xf32>
    %139 = vector.extract_strided_slice %135 {offsets = [0, 384], sizes = [8, 128], strides = [1, 1]} : vector<8x512xf32> to vector<8x128xf32>
    %140 = arith.negf %137 : vector<8x128xf32>
    %141 = math.exp %140 : vector<8x128xf32>
    %cst_51 = arith.constant 1.000000e+00 : f32
    %142 = vector.broadcast %cst_51 : f32 to vector<8x128xf32>
    %143 = arith.addf %142, %141 : vector<8x128xf32>
    %144 = arith.divf %142, %143 : vector<8x128xf32>
    %145 = arith.mulf %115, %144 : vector<8x128xf32>
    %146 = math.tanh %138 : vector<8x128xf32>
    %147 = arith.negf %136 : vector<8x128xf32>
    %148 = math.exp %147 : vector<8x128xf32>
    %cst_52 = arith.constant 1.000000e+00 : f32
    %149 = vector.broadcast %cst_52 : f32 to vector<8x128xf32>
    %150 = arith.addf %149, %148 : vector<8x128xf32>
    %151 = arith.divf %149, %150 : vector<8x128xf32>
    %152 = arith.mulf %146, %151 : vector<8x128xf32>
    %153 = arith.addf %145, %152 : vector<8x128xf32>
    %154 = arith.negf %139 : vector<8x128xf32>
    %155 = math.exp %154 : vector<8x128xf32>
    %cst_53 = arith.constant 1.000000e+00 : f32
    %156 = vector.broadcast %cst_53 : f32 to vector<8x128xf32>
    %157 = arith.addf %156, %155 : vector<8x128xf32>
    %158 = arith.divf %156, %157 : vector<8x128xf32>
    %159 = math.tanh %153 : vector<8x128xf32>
    %160 = arith.mulf %158, %159 : vector<8x128xf32>
    %161 = arith.index_cast %c3_i32 : i32 to index
    %c0_54 = arith.constant 0 : index
    %c0_55 = arith.constant 0 : index
    %162 = vector.load %arg5[%161, %c0_54, %c0_55] : memref<4x8x128xf32, #tpu.memory_space<vmem>>, vector<1x8x128xf32>
    %163 = vector.shape_cast %162 : vector<1x8x128xf32> to vector<8x128xf32>
    %164 = vector.shape_cast %160 : vector<8x128xf32> to vector<1x8x128xf32>
    tpu.vector_store %arg5[%161, %c0_54, %c0_55], %164 {strides = array<i32>} : memref<4x8x128xf32, #tpu.memory_space<vmem>>, vector<1x8x128xf32>,
    %165 = arith.index_cast %c3_i32 : i32 to index
    %c0_56 = arith.constant 0 : index
    %c0_57 = arith.constant 0 : index
    %166 = vector.load %arg6[%165, %c0_56, %c0_57] : memref<4x8x128xf32, #tpu.memory_space<vmem>>, vector<1x8x128xf32>
    %167 = vector.shape_cast %166 : vector<1x8x128xf32> to vector<8x128xf32>
    %168 = vector.shape_cast %153 : vector<8x128xf32> to vector<1x8x128xf32>
    tpu.vector_store %arg6[%165, %c0_56, %c0_57], %168 {strides = array<i32>} : memref<4x8x128xf32, #tpu.memory_space<vmem>>, vector<1x8x128xf32>,
    %c4_i32 = arith.constant 4 : i32
    %c0_58 = arith.constant 0 : index
    %c0_59 = arith.constant 0 : index
    %169 = vector.load %arg8[%c0_58, %c0_59] : memref<8x128xf32, #tpu.memory_space<vmem>>, vector<8x128xf32>
    tpu.vector_store %arg8[%c0_58, %c0_59], %160 {strides = array<i32>} : memref<8x128xf32, #tpu.memory_space<vmem>>, vector<8x128xf32>,
    %c0_60 = arith.constant 0 : index
    %c0_61 = arith.constant 0 : index
    %170 = vector.load %arg9[%c0_60, %c0_61] : memref<8x128xf32, #tpu.memory_space<vmem>>, vector<8x128xf32>
    tpu.vector_store %arg9[%c0_60, %c0_61], %153 {strides = array<i32>} : memref<8x128xf32, #tpu.memory_space<vmem>>, vector<8x128xf32>,
    return
  }
  func.func @transform_0(%arg0: i32, %arg1: i32) -> (i32, i32, i32) {
    %c0_i32 = arith.constant 0 : i32
    %c0_i32_0 = arith.constant 0 : i32
    return %arg1, %arg0, %c0_i32 : i32, i32, i32
  }
  func.func @transform_1(%arg0: i32, %arg1: i32) -> (i32, i32, i32) {
    %c0_i32 = arith.constant 0 : i32
    %c0_i32_0 = arith.constant 0 : i32
    %c0_i32_1 = arith.constant 0 : i32
    %c0_i32_2 = arith.constant 0 : i32
    return %c0_i32, %c0_i32_0, %c0_i32_1 : i32, i32, i32
  }
  func.func @transform_2(%arg0: i32, %arg1: i32) -> (i32, i32) {
    %c0_i32 = arith.constant 0 : i32
    %c0_i32_0 = arith.constant 0 : i32
    %c0_i32_1 = arith.constant 0 : i32
    return %c0_i32, %c0_i32_0 : i32, i32
  }
  func.func @transform_3(%arg0: i32, %arg1: i32) -> (i32, i32, i32) {
    %c0_i32 = arith.constant 0 : i32
    %c0_i32_0 = arith.constant 0 : i32
    return %arg1, %arg0, %c0_i32 : i32, i32, i32
  }
  func.func @transform_4(%arg0: i32, %arg1: i32) -> (i32, i32, i32) {
    %c0_i32 = arith.constant 0 : i32
    %c0_i32_0 = arith.constant 0 : i32
    return %arg1, %arg0, %c0_i32 : i32, i32, i32
  }
}

</mosaic_0001>

<llo_original>
// kernel: tpu_custom_call.1
$region0: #{tpu_custom_call.1}
  #allocation0 [shape = 'u32[]', space=smem, size = 0x4, offset = 0x4, fixed_abs, tag = 'smem constant byte address 0x4 - core index']
  #allocation1 [shape = 'u32[144,128]{1,0:T(1,128)}', space=vmem, size = 0x12000, scoped, tag = 'internal scratch']
  #allocation2 [shape = 'f32[4,8,512]{2,1,0:T(8,128)}', space=vmem, size = 0x10000, scoped, tag = 'scratch operand']
  #allocation3 [shape = 'f32[8,128]{1,0:T(8,128)}', space=vmem, size = 0x1000, scoped, tag = 'scratch operand']
  #allocation4 [shape = 'f32[8,128]{1,0:T(8,128)}', space=vmem, size = 0x1000, scoped, tag = 'scratch operand']
  %s0 = inlined_call_operand.hbm [shape: f32[8,8,128], index: 0, kind: input, shape index: {}]
  %s1 = inlined_call_operand.hbm [shape: f32[2,128,512], index: 1, kind: input, shape index: {}]
  %s2 = inlined_call_operand.vmem [shape: f32[1,512], index: 2, kind: input, shape index: {}]
  %s3 = inlined_call_operand.hbm [shape: f32[8,8,128], index: 3, kind: output, shape index: {0}]
  %s4 = inlined_call_operand.hbm [shape: f32[8,8,128], index: 4, kind: output, shape index: {1}]
  %5 = xla_tuple %s3, %s4
  %s6 = sld [smem:[#allocation0]]
  $region65: #{tpu_custom_call.1} parent=0
    _
  %s8 = ssub.s32 1, %s6
  %s9 = scalar_select 0, %s8, %s6
  $region1: #{tpu_custom_call.1} parent=0
    #allocation5 [shape = 'u8[32768]{0}', space=vmem, size = 0x8000, scoped, tag = 'input window, operand 0']
    #allocation6 [shape = 's32[2]{0}', space=sflag, size = 0x8, scoped, tag = 'scoped memory for tpu_custom_call.1']
    #allocation7 [shape = 's32[2]{0}', space=sflag, size = 0x8, scoped, tag = 'scoped memory for tpu_custom_call.1']
    #allocation8 [shape = 'u8[524288]{0}', space=vmem, size = 0x80000, scoped, tag = 'input window, operand 1, single buffered']
    #allocation9 [shape = 's32[1]{0}', space=sflag, size = 0x4, scoped, tag = 'scoped memory for tpu_custom_call.1']
    #allocation10 [shape = 'u8[32768]{0}', space=vmem, size = 0x8000, scoped, tag = 'output window, operand 0']
    #allocation11 [shape = 'u8[32768]{0}', space=vmem, size = 0x8000, scoped, tag = 'output window, operand 1']
    #allocation12 [shape = 's32[2]{0}', space=sflag, size = 0x8, scoped, tag = 'scoped memory for tpu_custom_call.1']
    %10 = vsyncpa [#allocation6], 0
    %s11 = scalar_lea.sflag [#allocation6], 1
    %12 = vsyncpa %s11, 0
    %13 = vsyncpa [#allocation9], 0
    %14 = vsyncpa [#allocation7], 0
    %s15 = scalar_lea.sflag [#allocation7], 1
    %16 = vsyncpa %s15, 0
    %17 = vsyncpa [#allocation12], 0
    %s18 = scalar_lea.sflag [#allocation12], 1
    %19 = vsyncpa %s18, 0
    loop: start=0, step=1, limit=4
    $region2: #{tpu_custom_call.1} parent=1 // loop_pre_header
      _
    $region3: #{tpu_custom_call.1} parent=1 // loop_header
      %s21 = sphi 0, %s25
      %p22 = scmp.ge.s32.totalorder %s21, 4
      %s28 = sphi 0, %s40
      %s29 = sphi 0, %s36
      %s30 = sphi 0, %s28
      %s31 = sphi 0, %s29
      %s32 = sphi 0, %s30
      %s33 = sphi 0, %s31
      %s45 = sphi 0, %s47
      %s48 = sphi 0, %s45
      %s49 = sphi 0, %s48
      %s65 = sphi 0, %s49
      %s69 = sphi 0, %s69
      %s71 = sphi 0, %s69
      %s72 = sphi 0, %s71
      %s86 = sphi 0, %s72
      %s90 = sphi 0, %s90
      %s92 = sphi 0, %s90
      %s93 = sphi 0, %s92
      %s107 = sphi 0, %s93
      %s115 = sphi 0, %s117
      %s118 = sphi 0, %s115
      %s119 = sphi 0, %s118
      %s135 = sphi 0, %s119
      %s143 = sphi 0, %s145
      %s146 = sphi 0, %s143
      %s147 = sphi 0, %s146
      %s163 = sphi 0, %s147
    $region4: #{tpu_custom_call.1} parent=1 // loop_header_branch
      %24 = sbr.rel (%p22) target = $region8
    $region5: #{tpu_custom_call.1} parent=1 // loop_body
      %s26 = ssub.s32 %s21, 1
      %s27 = ssub.s32 %s21, 2
      %s34 = sadd.s32 1, %s29
      %p35 = scmp.ge.s32.totalorder %s34, 2
      %s36 = scalar_select %p35, 0, %s34
      %s37 = sadd.s32 1, %s28
      %s38 = scalar_select %p35, %s37, %s28
      %p39 = scmp.ge.s32.totalorder %s38, 1
      %s40 = scalar_select %p39, 0, %s38
      %s41 = ssub.s32 %s29, %s36
      %s42 = ssub.s32 %s28, %s40
      %s43 = sor.u32 %s41, %s42
      %p44 = scmp.eq.s32.totalorder %s43, 0
      %s46 = sadd.s32 %s45, 1
      %s47 = scalar_select %p44, %s45, %s46
      %p50 = pneg %p44
      %p51 = scmp.eq.s32.totalorder %s21, 1
      %p52 = por %p50, %p51
      %p53 = scmp.ne.s32.totalorder %s45, %s48
      %p54 = scmp.eq.s32.totalorder %s21, 0
      %p55 = por %p53, %p54
      %p56 = scmp.ne.s32.totalorder %s45, %s48
      %p57 = scmp.eq.s32.totalorder %s26, 1
      %p58 = por %p56, %p57
      %p59 = scmp.ne.s32.totalorder %s48, %s49
      %p60 = scmp.eq.s32.totalorder %s26, 0
      %p61 = por %p59, %p60
      %p62 = scmp.ne.s32.totalorder %s48, %s49
      %p63 = scmp.eq.s32.totalorder %s27, 1
      %p64 = por %p62, %p63
      %p66 = scmp.ne.s32.totalorder %s49, %s65
      %p67 = scmp.eq.s32.totalorder %s27, 0
      %p68 = por %p66, %p67
      %s70 = sadd.s32 %s69, 1
      %p73 = scmp.eq.s32.totalorder %s21, 1
      %p74 = scmp.ne.s32.totalorder %s69, %s71
      %p75 = scmp.eq.s32.totalorder %s21, 0
      %p76 = por %p74, %p75
      %p77 = scmp.ne.s32.totalorder %s69, %s71
      %p78 = scmp.eq.s32.totalorder %s26, 1
      %p79 = por %p77, %p78
      %p80 = scmp.ne.s32.totalorder %s71, %s72
      %p81 = scmp.eq.s32.totalorder %s26, 0
      %p82 = por %p80, %p81
      %p83 = scmp.ne.s32.totalorder %s71, %s72
      %p84 = scmp.eq.s32.totalorder %s27, 1
      %p85 = por %p83, %p84
      %p87 = scmp.ne.s32.totalorder %s72, %s86
      %p88 = scmp.eq.s32.totalorder %s27, 0
      %p89 = por %p87, %p88
      %s91 = sadd.s32 %s90, 1
      %p94 = scmp.eq.s32.totalorder %s21, 1
      %p95 = scmp.ne.s32.totalorder %s90, %s92
      %p96 = scmp.eq.s32.totalorder %s21, 0
      %p97 = por %p95, %p96
      %p98 = scmp.ne.s32.totalorder %s90, %s92
      %p99 = scmp.eq.s32.totalorder %s26, 1
      %p100 = por %p98, %p99
      %p101 = scmp.ne.s32.totalorder %s92, %s93
      %p102 = scmp.eq.s32.totalorder %s26, 0
      %p103 = por %p101, %p102
      %p104 = scmp.ne.s32.totalorder %s92, %s93
      %p105 = scmp.eq.s32.totalorder %s27, 1
      %p106 = por %p104, %p105
      %p108 = scmp.ne.s32.totalorder %s93, %s107
      %p109 = scmp.eq.s32.totalorder %s27, 0
      %p110 = por %p108, %p109
      %s111 = ssub.s32 %s29, %s36
      %s112 = ssub.s32 %s28, %s40
      %s113 = sor.u32 %s111, %s112
      %p114 = scmp.eq.s32.totalorder %s113, 0
      %s116 = sadd.s32 %s115, 1
      %s117 = scalar_select %p114, %s115, %s116
      %p120 = pneg %p114
      %p121 = scmp.eq.s32.totalorder %s21, 1
      %p122 = por %p120, %p121
      %p123 = scmp.ne.s32.totalorder %s115, %s118
      %p124 = scmp.eq.s32.totalorder %s21, 0
      %p125 = por %p123, %p124
      %p126 = scmp.ne.s32.totalorder %s115, %s118
      %p127 = scmp.eq.s32.totalorder %s26, 1
      %p128 = por %p126, %p127
      %p129 = scmp.ne.s32.totalorder %s118, %s119
      %p130 = scmp.eq.s32.totalorder %s26, 0
      %p131 = por %p129, %p130
      %p132 = scmp.ne.s32.totalorder %s118, %s119
      %p133 = scmp.eq.s32.totalorder %s27, 1
      %p134 = por %p132, %p133
      %p136 = scmp.ne.s32.totalorder %s119, %s135
      %p137 = scmp.eq.s32.totalorder %s27, 0
      %p138 = por %p136, %p137
      %s139 = ssub.s32 %s29, %s36
      %s140 = ssub.s32 %s28, %s40
      %s141 = sor.u32 %s139, %s140
      %p142 = scmp.eq.s32.totalorder %s141, 0
      %s144 = sadd.s32 %s143, 1
      %s145 = scalar_select %p142, %s143, %s144
      %p148 = pneg %p142
      %p149 = scmp.eq.s32.totalorder %s21, 1
      %p150 = por %p148, %p149
      %p151 = scmp.ne.s32.totalorder %s143, %s146
      %p152 = scmp.eq.s32.totalorder %s21, 0
      %p153 = por %p151, %p152
      %p154 = scmp.ne.s32.totalorder %s143, %s146
      %p155 = scmp.eq.s32.totalorder %s26, 1
      %p156 = por %p154, %p155
      %p157 = scmp.ne.s32.totalorder %s146, %s147
      %p158 = scmp.eq.s32.totalorder %s26, 0
      %p159 = por %p157, %p158
      %p160 = scmp.ne.s32.totalorder %s146, %s147
      %p161 = scmp.eq.s32.totalorder %s27, 1
      %p162 = por %p160, %p161
      %p164 = scmp.ne.s32.totalorder %s147, %s163
      %p165 = scmp.eq.s32.totalorder %s27, 0
      %p166 = por %p164, %p165
      %p167 = scmp.le.s32.totalorder 1, %s21
      %p168 = scmp.lt.s32.totalorder %s21, 3
      %p169 = pnand %p167, %p168
      %p170 = pneg %p169
      // Predicated region
      $region9: #{tpu_custom_call.1} parent=5 // pred_check
        _
      $region10: #{tpu_custom_call.1} parent=5 // pred_check_branch
        %172 = sbr.rel (%p169) target = $region12
      $region11: #{tpu_custom_call.1} parent=5 // pred_region
        %s173 = ssub.s32 %s21, 1
        // Predicated region
        $region13: #{tpu_custom_call.1} parent=11 // pred_check
          %p174 = pneg %p82
        $region14: #{tpu_custom_call.1} parent=11 // pred_check_branch
          %176 = sbr.rel (%p174) target = $region16
        $region15: #{tpu_custom_call.1} parent=11 // pred_region
          %s178 = ssub.s32 16384, 16384
          %179 = vsyncadd [#allocation9], %s178
          %s180 = sshll.u32 [#allocation8], 4
          %s181 = int_to_ptr.vmem [resolvable:$true] %s180
          %186 = dma.hbm_to_vmem [thread:$0]  %s1, 16384, %s181, [#allocation9], 512, 512, 32
        $region16: #{tpu_custom_call.1} parent=11 // pred_fallthru
          _
        // Predicated region
        $region17: #{tpu_custom_call.1} parent=11 // pred_check
          %p187 = pneg %p103
        $region18: #{tpu_custom_call.1} parent=11 // pred_check_branch
          %189 = sbr.rel (%p187) target = $region20
        $region19: #{tpu_custom_call.1} parent=11 // pred_region
          _
        $region20: #{tpu_custom_call.1} parent=11 // pred_fallthru
          _
      $region12: #{tpu_custom_call.1} parent=5 // pred_fallthru
        _
      %p190 = scmp.lt.s32.totalorder %s21, 2
      // Predicated region
      $region21: #{tpu_custom_call.1} parent=5 // pred_check
        %p191 = pneg %p190
      $region22: #{tpu_custom_call.1} parent=5 // pred_check_branch
        %193 = sbr.rel (%p191) target = $region24
      $region23: #{tpu_custom_call.1} parent=5 // pred_region
        // Predicated region
        $region25: #{tpu_custom_call.1} parent=23 // pred_check
          %p194 = pneg %p55
        $region26: #{tpu_custom_call.1} parent=23 // pred_check_branch
          %196 = sbr.rel (%p194) target = $region28
        $region27: #{tpu_custom_call.1} parent=23 // pred_region
          %s197 = sand.u32 %s45, 1
          %s198 = scalar_lea.sflag [#allocation6], %s197
          %s199 = sand.u32 %s45, 1
          %s200 = smul.addr %s199, 32
          %s201 = scalar_lea.vmem [#allocation5], %s200
          %s202 = smul.u32 4, %s29
          %s204 = ssub.s32 512, 512
          %205 = vsyncadd %s198, %s204
          %s206 = sadd.s32 %s28, %s202
          %s207 = smul.addr %s206, 128
          %s208 = scalar_lea.hbm %s0, %s207
          %s209 = sshll.u32 %s201, 4
          %s210 = int_to_ptr.vmem [resolvable:$true] %s209
          %215 = dma.hbm_to_vmem [thread:$0]  %s208, 512, %s210, %s198, 128, 128, 8
        $region28: #{tpu_custom_call.1} parent=23 // pred_fallthru
          _
      $region24: #{tpu_custom_call.1} parent=5 // pred_fallthru
        _
      %p216 = scmp.le.s32.totalorder 1, %s21
      %p217 = scmp.lt.s32.totalorder %s21, 3
      %p218 = pnand %p216, %p217
      %p219 = pneg %p218
      // Predicated region
      $region29: #{tpu_custom_call.1} parent=5 // pred_check
        _
      $region30: #{tpu_custom_call.1} parent=5 // pred_check_branch
        %221 = sbr.rel (%p218) target = $region32
      $region31: #{tpu_custom_call.1} parent=5 // pred_region
        %s222 = ssub.s32 %s21, 1
        %s223 = sand.u32 %s48, 1
        %s224 = scalar_lea.sflag [#allocation6], %s223
        %s225 = sand.u32 %s48, 1
        %s226 = smul.addr %s225, 32
        %s227 = scalar_lea.vmem [#allocation5], %s226
        // Predicated region
        $region33: #{tpu_custom_call.1} parent=31 // pred_check
          %p228 = pneg %p61
        $region34: #{tpu_custom_call.1} parent=31 // pred_check_branch
          %230 = sbr.rel (%p228) target = $region36
        $region35: #{tpu_custom_call.1} parent=31 // pred_region
          %231 = dma.done %s224, 512
        $region36: #{tpu_custom_call.1} parent=31 // pred_fallthru
          _
        // Predicated region
        $region37: #{tpu_custom_call.1} parent=31 // pred_check
          %p232 = pneg %p82
        $region38: #{tpu_custom_call.1} parent=31 // pred_check_branch
          %234 = sbr.rel (%p232) target = $region40
        $region39: #{tpu_custom_call.1} parent=31 // pred_region
          %235 = dma.done [#allocation9], 16384
        $region40: #{tpu_custom_call.1} parent=31 // pred_fallthru
          _
        %s236 = sand.u32 %s48, 1
        %s237 = scalar_lea.sflag [#allocation6], %s236
        %s238 = sand.u32 %s48, 1
        %s239 = smul.addr %s238, 32
        %s240 = scalar_lea.vmem [#allocation5], %s239
        %p241 = pneg %p61
        %p242 = pneg %p58
        %p243 = pneg %p82
        %p244 = pneg %p79
        %p245 = pneg %p103
        %p246 = pneg %p100
        %p247 = pneg %p131
        %p248 = pneg %p128
        %s249 = sand.u32 %s118, 1
        %s250 = scalar_lea.sflag [#allocation7], %s249
        %s251 = sand.u32 %s118, 1
        %s252 = smul.addr %s251, 32
        %s253 = scalar_lea.vmem [#allocation10], %s252
        %p254 = pneg %p159
        %p255 = pneg %p156
        %s256 = sand.u32 %s146, 1
        %s257 = scalar_lea.sflag [#allocation12], %s256
        %s258 = sand.u32 %s146, 1
        %s259 = smul.addr %s258, 32
        %s260 = scalar_lea.vmem [#allocation11], %s259
        %s261 = smul.u32 4, %s31
        %s262 = smul.u32 4, %s31
        %s263 = smul.u32 4, %s31
        %p264 = scmp.eq.s32.totalorder %s31, 0
        // Predicated region
        $region41: #{tpu_custom_call.1} parent=31 // pred_check
          %p265 = pneg %p264
        $region42: #{tpu_custom_call.1} parent=31 // pred_check_branch
          %267 = sbr.rel (%p265) target = $region44
        $region43: #{tpu_custom_call.1} parent=31 // pred_region
          %268 = vst [vmem:[#allocation3] sm:$0xff] 0.0
          %269 = vst [vmem:[#allocation4] sm:$0xff] 0.0
        $region44: #{tpu_custom_call.1} parent=31 // pred_fallthru
          _
        %v270 = vld [vmem:[%s227] sm:$0xff]
        %v271 = vld [vmem:[%s227 + $0x8] sm:$0xff]
        %v272 = vld [vmem:[%s227 + $0x10] sm:$0xff]
        %v273 = vld [vmem:[%s227 + $0x18] sm:$0xff]
        %v274 = vld [vmem:[#allocation8] sm:$0xff]
        %v275 = vld [vmem:[#allocation8 + $0x8] sm:$0xff]
        %v276 = vld [vmem:[#allocation8 + $0x10] sm:$0xff]
        %v277 = vld [vmem:[#allocation8 + $0x18] sm:$0xff]
        %v278 = vld [vmem:[#allocation8 + $0x20] sm:$0xff]
        %v279 = vld [vmem:[#allocation8 + $0x28] sm:$0xff]
        %v280 = vld [vmem:[#allocation8 + $0x30] sm:$0xff]
        %v281 = vld [vmem:[#allocation8 + $0x38] sm:$0xff]
        %v282 = vld [vmem:[#allocation8 + $0x40] sm:$0xff]
        %v283 = vld [vmem:[#allocation8 + $0x48] sm:$0xff]
        %v284 = vld [vmem:[#allocation8 + $0x50] sm:$0xff]
        %v285 = vld [vmem:[#allocation8 + $0x58] sm:$0xff]
        %v286 = vld [vmem:[#allocation8 + $0x60] sm:$0xff]
        %v287 = vld [vmem:[#allocation8 + $0x68] sm:$0xff]
        %v288 = vld [vmem:[#allocation8 + $0x70] sm:$0xff]
        %v289 = vld [vmem:[#allocation8 + $0x78] sm:$0xff]
        %v290 = vld [vmem:[#allocation8 + $0x80] sm:$0xff]
        %v291 = vld [vmem:[#allocation8 + $0x88] sm:$0xff]
        %v292 = vld [vmem:[#allocation8 + $0x90] sm:$0xff]
        %v293 = vld [vmem:[#allocation8 + $0x98] sm:$0xff]
        %v294 = vld [vmem:[#allocation8 + $0xa0] sm:$0xff]
        %v295 = vld [vmem:[#allocation8 + $0xa8] sm:$0xff]
        %v296 = vld [vmem:[#allocation8 + $0xb0] sm:$0xff]
        %v297 = vld [vmem:[#allocation8 + $0xb8] sm:$0xff]
        %v298 = vld [vmem:[#allocation8 + $0xc0] sm:$0xff]
        %v299 = vld [vmem:[#allocation8 + $0xc8] sm:$0xff]
        %v300 = vld [vmem:[#allocation8 + $0xd0] sm:$0xff]
        %v301 = vld [vmem:[#allocation8 + $0xd8] sm:$0xff]
        %v302 = vld [vmem:[#allocation8 + $0xe0] sm:$0xff]
        %v303 = vld [vmem:[#allocation8 + $0xe8] sm:$0xff]
        %v304 = vld [vmem:[#allocation8 + $0xf0] sm:$0xff]
        %v305 = vld [vmem:[#allocation8 + $0xf8] sm:$0xff]
        %v306 = vld [vmem:[#allocation8 + $0x100] sm:$0xff]
        %v307 = vld [vmem:[#allocation8 + $0x108] sm:$0xff]
        %v308 = vld [vmem:[#allocation8 + $0x110] sm:$0xff]
        %v309 = vld [vmem:[#allocation8 + $0x118] sm:$0xff]
        %v310 = vld [vmem:[#allocation8 + $0x120] sm:$0xff]
        %v311 = vld [vmem:[#allocation8 + $0x128] sm:$0xff]
        %v312 = vld [vmem:[#allocation8 + $0x130] sm:$0xff]
        %v313 = vld [vmem:[#allocation8 + $0x138] sm:$0xff]
        %v314 = vld [vmem:[#allocation8 + $0x140] sm:$0xff]
        %v315 = vld [vmem:[#allocation8 + $0x148] sm:$0xff]
        %v316 = vld [vmem:[#allocation8 + $0x150] sm:$0xff]
        %v317 = vld [vmem:[#allocation8 + $0x158] sm:$0xff]
        %v318 = vld [vmem:[#allocation8 + $0x160] sm:$0xff]
        %v319 = vld [vmem:[#allocation8 + $0x168] sm:$0xff]
        %v320 = vld [vmem:[#allocation8 + $0x170] sm:$0xff]
        %v321 = vld [vmem:[#allocation8 + $0x178] sm:$0xff]
        %v322 = vld [vmem:[#allocation8 + $0x180] sm:$0xff]
        %v323 = vld [vmem:[#allocation8 + $0x188] sm:$0xff]
        %v324 = vld [vmem:[#allocation8 + $0x190] sm:$0xff]
        %v325 = vld [vmem:[#allocation8 + $0x198] sm:$0xff]
        %v326 = vld [vmem:[#allocation8 + $0x1a0] sm:$0xff]
        %v327 = vld [vmem:[#allocation8 + $0x1a8] sm:$0xff]
        %v328 = vld [vmem:[#allocation8 + $0x1b0] sm:$0xff]
        %v329 = vld [vmem:[#allocation8 + $0x1b8] sm:$0xff]
        %v330 = vld [vmem:[#allocation8 + $0x1c0] sm:$0xff]
        %v331 = vld [vmem:[#allocation8 + $0x1c8] sm:$0xff]
        %v332 = vld [vmem:[#allocation8 + $0x1d0] sm:$0xff]
        %v333 = vld [vmem:[#allocation8 + $0x1d8] sm:$0xff]
        %v334 = vld [vmem:[#allocation8 + $0x1e0] sm:$0xff]
        %v335 = vld [vmem:[#allocation8 + $0x1e8] sm:$0xff]
        %v336 = vld [vmem:[#allocation8 + $0x1f0] sm:$0xff]
        %v337 = vld [vmem:[#allocation8 + $0x1f8] sm:$0xff]
        %v338 = vld [vmem:[%s2] sm:$0xf]
        %v340 = vlaneseq
        %v341 = vshrl.u32 %v340, 7
        %v342 = vsub.s32 0, %v341
        %v343 = vrot.slane %v338, %v342
        %v344 = vlaneseq
        %v345 = vshrl.u32 %v344, 7
        %v346 = vsub.s32 1, %v345
        %v347 = vrot.slane %v338, %v346
        %v348 = vlaneseq
        %v349 = vshrl.u32 %v348, 7
        %v350 = vsub.s32 2, %v349
        %v351 = vrot.slane %v338, %v350
        %v352 = vlaneseq
        %v353 = vshrl.u32 %v352, 7
        %v354 = vsub.s32 3, %v353
        %v355 = vrot.slane %v338, %v354
        %360 = vmatprep.subr.mxu0 %v275
        %361 = vmatpush1.msra.mxu0 %v274
        %362 = vmatprep.subr.mxu0 %v279
        %363 = vmatpush1.msra.mxu0 %v278
        %364 = vmatprep.subr.mxu0 %v283
        %365 = vmatpush1.msra.mxu0 %v282
        %366 = vmatprep.subr.mxu0 %v287
        %367 = vmatpush1.msra.mxu0 %v286
        %368 = vmatprep.subr.mxu0 %v291
        %369 = vmatpush1.msra.mxu0 %v290
        %370 = vmatprep.subr.mxu0 %v295
        %371 = vmatpush1.msra.mxu0 %v294
        %372 = vmatprep.subr.mxu0 %v299
        %373 = vmatpush1.msra.mxu0 %v298
        %374 = vmatprep.subr.mxu0 %v303
        %375 = vmatpush1.msra.mxu0 %v302
        %376 = vmatprep.subr.mxu0 %v307
        %377 = vmatpush1.msra.mxu0 %v306
        %378 = vmatprep.subr.mxu0 %v311
        %379 = vmatpush1.msra.mxu0 %v310
        %380 = vmatprep.subr.mxu0 %v315
        %381 = vmatpush1.msra.mxu0 %v314
        %382 = vmatprep.subr.mxu0 %v319
        %383 = vmatpush1.msra.mxu0 %v318
        %384 = vmatprep.subr.mxu0 %v323
        %385 = vmatpush1.msra.mxu0 %v322
        %386 = vmatprep.subr.mxu0 %v327
        %387 = vmatpush1.msra.mxu0 %v326
        %388 = vmatprep.subr.mxu0 %v331
        %389 = vmatpush1.msra.mxu0 %v330
        %390 = vmatprep.subr.mxu0 %v335
        %391 = vmatpush1.msra.mxu0 %v334
        %392 = vmatprep.subr.mxu0 0.0
        %393 = vmatpush1.msra.mxu0 0.0
        %394 = vmatprep.subr.mxu0 0.0
        %395 = vmatpush1.msra.mxu0 0.0
        %396 = vmatprep.subr.mxu0 0.0
        %397 = vmatpush1.msra.mxu0 0.0
        %398 = vmatprep.subr.mxu0 0.0
        %399 = vmatpush1.msra.mxu0 0.0
        %400 = vmatprep.subr.mxu0 0.0
        %401 = vmatpush1.msra.mxu0 0.0
        %402 = vmatprep.subr.mxu0 0.0
        %403 = vmatpush1.msra.mxu0 0.0
        %404 = vmatprep.subr.mxu0 0.0
        %405 = vmatpush1.msra.mxu0 0.0
        %406 = vmatprep.subr.mxu0 0.0
        %407 = vmatpush1.msra.mxu0 0.0
        %408 = vmatprep.subr.mxu0 0.0
        %409 = vmatpush1.msra.mxu0 0.0
        %410 = vmatprep.subr.mxu0 0.0
        %411 = vmatpush1.msra.mxu0 0.0
        %412 = vmatprep.subr.mxu0 0.0
        %413 = vmatpush1.msra.mxu0 0.0
        %414 = vmatprep.subr.mxu0 0.0
        %415 = vmatpush1.msra.mxu0 0.0
        %416 = vmatprep.subr.mxu0 0.0
        %417 = vmatpush1.msra.mxu0 0.0
        %418 = vmatprep.subr.mxu0 0.0
        %419 = vmatpush1.msra.mxu0 0.0
        %420 = vmatprep.subr.mxu0 0.0
        %421 = vmatpush1.msra.mxu0 0.0
        %422 = vmatprep.subr.mxu0 0.0
        %423 = vmatpush1.msra.mxu0 0.0
        %424 = vmatprep.mubr.f32.mxu0 0.0
        %425 = vmatmul.mubr.f32.gmra.mrb[0].mxu0 %v270
        %v426 = vpop.f32.mrb[0].mxu0
        %v427 = vadd.f32 %v343, %v426
        %v428 = vpop.f32.mrb[0].mxu0
        %v429 = vadd.f32 %v347, %v428
        %430 = vmatprep.mubr.f32.mxu0 0.0
        %431 = vmatmul.mubr.f32.gmra.mrb[0].mxu0 %v271
        %v432 = vpop.f32.mrb[0].mxu0
        %v433 = vadd.f32 %v343, %v432
        %v434 = vpop.f32.mrb[0].mxu0
        %v435 = vadd.f32 %v347, %v434
        %436 = vmatprep.mubr.f32.mxu0 0.0
        %437 = vmatmul.mubr.f32.gmra.mrb[0].mxu0 %v272
        %v438 = vpop.f32.mrb[0].mxu0
        %v439 = vadd.f32 %v343, %v438
        %v440 = vpop.f32.mrb[0].mxu0
        %v441 = vadd.f32 %v347, %v440
        %442 = vmatprep.mubr.f32.mxu0 0.0
        %443 = vmatmul.mubr.f32.gmra.mrb[0].mxu0 %v273
        %v444 = vpop.f32.mrb[0].mxu0
        %v445 = vadd.f32 %v343, %v444
        %v446 = vpop.f32.mrb[0].mxu0
        %v447 = vadd.f32 %v347, %v446
        %448 = vdwg.mxu0
        %449 = vmatprep.subr.mxu0 %v277
        %450 = vmatpush1.msra.mxu0 %v276
        %451 = vmatprep.subr.mxu0 %v281
        %452 = vmatpush1.msra.mxu0 %v280
        %453 = vmatprep.subr.mxu0 %v285
        %454 = vmatpush1.msra.mxu0 %v284
        %455 = vmatprep.subr.mxu0 %v289
        %456 = vmatpush1.msra.mxu0 %v288
        %457 = vmatprep.subr.mxu0 %v293
        %458 = vmatpush1.msra.mxu0 %v292
        %459 = vmatprep.subr.mxu0 %v297
        %460 = vmatpush1.msra.mxu0 %v296
        %461 = vmatprep.subr.mxu0 %v301
        %462 = vmatpush1.msra.mxu0 %v300
        %463 = vmatprep.subr.mxu0 %v305
        %464 = vmatpush1.msra.mxu0 %v304
        %465 = vmatprep.subr.mxu0 %v309
        %466 = vmatpush1.msra.mxu0 %v308
        %467 = vmatprep.subr.mxu0 %v313
        %468 = vmatpush1.msra.mxu0 %v312
        %469 = vmatprep.subr.mxu0 %v317
        %470 = vmatpush1.msra.mxu0 %v316
        %471 = vmatprep.subr.mxu0 %v321
        %472 = vmatpush1.msra.mxu0 %v320
        %473 = vmatprep.subr.mxu0 %v325
        %474 = vmatpush1.msra.mxu0 %v324
        %475 = vmatprep.subr.mxu0 %v329
        %476 = vmatpush1.msra.mxu0 %v328
        %477 = vmatprep.subr.mxu0 %v333
        %478 = vmatpush1.msra.mxu0 %v332
        %479 = vmatprep.subr.mxu0 %v337
        %480 = vmatpush1.msra.mxu0 %v336
        %481 = vmatprep.subr.mxu0 0.0
        %482 = vmatpush1.msra.mxu0 0.0
        %483 = vmatprep.subr.mxu0 0.0
        %484 = vmatpush1.msra.mxu0 0.0
        %485 = vmatprep.subr.mxu0 0.0
        %486 = vmatpush1.msra.mxu0 0.0
        %487 = vmatprep.subr.mxu0 0.0
        %488 = vmatpush1.msra.mxu0 0.0
        %489 = vmatprep.subr.mxu0 0.0
        %490 = vmatpush1.msra.mxu0 0.0
        %491 = vmatprep.subr.mxu0 0.0
        %492 = vmatpush1.msra.mxu0 0.0
        %493 = vmatprep.subr.mxu0 0.0
        %494 = vmatpush1.msra.mxu0 0.0
        %495 = vmatprep.subr.mxu0 0.0
        %496 = vmatpush1.msra.mxu0 0.0
        %497 = vmatprep.subr.mxu0 0.0
        %498 = vmatpush1.msra.mxu0 0.0
        %499 = vmatprep.subr.mxu0 0.0
        %500 = vmatpush1.msra.mxu0 0.0
        %501 = vmatprep.subr.mxu0 0.0
        %502 = vmatpush1.msra.mxu0 0.0
        %503 = vmatprep.subr.mxu0 0.0
        %504 = vmatpush1.msra.mxu0 0.0
        %505 = vmatprep.subr.mxu0 0.0
        %506 = vmatpush1.msra.mxu0 0.0
        %507 = vmatprep.subr.mxu0 0.0
        %508 = vmatpush1.msra.mxu0 0.0
        %509 = vmatprep.subr.mxu0 0.0
        %510 = vmatpush1.msra.mxu0 0.0
        %511 = vmatprep.subr.mxu0 0.0
        %512 = vmatpush1.msra.mxu0 0.0
        %513 = vmatprep.mubr.f32.mxu0 0.0
        %514 = vmatmul.mubr.f32.gmra.mrb[0].mxu0 %v270
        %v515 = vpop.f32.mrb[0].mxu0
        %v516 = vadd.f32 %v351, %v515
        %v517 = vpop.f32.mrb[0].mxu0
        %v518 = vadd.f32 %v355, %v517
        %519 = vmatprep.mubr.f32.mxu0 0.0
        %520 = vmatmul.mubr.f32.gmra.mrb[0].mxu0 %v271
        %v521 = vpop.f32.mrb[0].mxu0
        %v522 = vadd.f32 %v351, %v521
        %v523 = vpop.f32.mrb[0].mxu0
        %v524 = vadd.f32 %v355, %v523
        %525 = vmatprep.mubr.f32.mxu0 0.0
        %526 = vmatmul.mubr.f32.gmra.mrb[0].mxu0 %v272
        %v527 = vpop.f32.mrb[0].mxu0
        %v528 = vadd.f32 %v351, %v527
        %v529 = vpop.f32.mrb[0].mxu0
        %v530 = vadd.f32 %v355, %v529
        %531 = vmatprep.mubr.f32.mxu0 0.0
        %532 = vmatmul.mubr.f32.gmra.mrb[0].mxu0 %v273
        %v533 = vpop.f32.mrb[0].mxu0
        %v534 = vadd.f32 %v351, %v533
        %v535 = vpop.f32.mrb[0].mxu0
        %v536 = vadd.f32 %v355, %v535
        %537 = vdwg.mxu0
        %538 = vst [vmem:[#allocation2] sm:$0xff] %v427
        %539 = vst [vmem:[#allocation2 + $0x8] sm:$0xff] %v429
        %540 = vst [vmem:[#allocation2 + $0x10] sm:$0xff] %v516
        %541 = vst [vmem:[#allocation2 + $0x18] sm:$0xff] %v518
        %542 = vst [vmem:[#allocation2 + $0x20] sm:$0xff] %v433
        %543 = vst [vmem:[#allocation2 + $0x28] sm:$0xff] %v435
        %544 = vst [vmem:[#allocation2 + $0x30] sm:$0xff] %v522
        %545 = vst [vmem:[#allocation2 + $0x38] sm:$0xff] %v524
        %546 = vst [vmem:[#allocation2 + $0x40] sm:$0xff] %v439
        %547 = vst [vmem:[#allocation2 + $0x48] sm:$0xff] %v441
        %548 = vst [vmem:[#allocation2 + $0x50] sm:$0xff] %v528
        %549 = vst [vmem:[#allocation2 + $0x58] sm:$0xff] %v530
        %550 = vst [vmem:[#allocation2 + $0x60] sm:$0xff] %v445
        %551 = vst [vmem:[#allocation2 + $0x68] sm:$0xff] %v447
        %552 = vst [vmem:[#allocation2 + $0x70] sm:$0xff] %v534
        %553 = vst [vmem:[#allocation2 + $0x78] sm:$0xff] %v536
        %s554 = scalar_lea.vmem [#allocation8], 512
        %v555 = vld [vmem:[%s554] sm:$0xff]
        %v556 = vld [vmem:[%s554 + $0x8] sm:$0xff]
        %v557 = vld [vmem:[%s554 + $0x10] sm:$0xff]
        %v558 = vld [vmem:[%s554 + $0x18] sm:$0xff]
        %v559 = vld [vmem:[%s554 + $0x20] sm:$0xff]
        %v560 = vld [vmem:[%s554 + $0x28] sm:$0xff]
        %v561 = vld [vmem:[%s554 + $0x30] sm:$0xff]
        %v562 = vld [vmem:[%s554 + $0x38] sm:$0xff]
        %v563 = vld [vmem:[%s554 + $0x40] sm:$0xff]
        %v564 = vld [vmem:[%s554 + $0x48] sm:$0xff]
        %v565 = vld [vmem:[%s554 + $0x50] sm:$0xff]
        %v566 = vld [vmem:[%s554 + $0x58] sm:$0xff]
        %v567 = vld [vmem:[%s554 + $0x60] sm:$0xff]
        %v568 = vld [vmem:[%s554 + $0x68] sm:$0xff]
        %v569 = vld [vmem:[%s554 + $0x70] sm:$0xff]
        %v570 = vld [vmem:[%s554 + $0x78] sm:$0xff]
        %v571 = vld [vmem:[%s554 + $0x80] sm:$0xff]
        %v572 = vld [vmem:[%s554 + $0x88] sm:$0xff]
        %v573 = vld [vmem:[%s554 + $0x90] sm:$0xff]
        %v574 = vld [vmem:[%s554 + $0x98] sm:$0xff]
        %v575 = vld [vmem:[%s554 + $0xa0] sm:$0xff]
        %v576 = vld [vmem:[%s554 + $0xa8] sm:$0xff]
        %v577 = vld [vmem:[%s554 + $0xb0] sm:$0xff]
        %v578 = vld [vmem:[%s554 + $0xb8] sm:$0xff]
        %v579 = vld [vmem:[%s554 + $0xc0] sm:$0xff]
        %v580 = vld [vmem:[%s554 + $0xc8] sm:$0xff]
        %v581 = vld [vmem:[%s554 + $0xd0] sm:$0xff]
        %v582 = vld [vmem:[%s554 + $0xd8] sm:$0xff]
        %v583 = vld [vmem:[%s554 + $0xe0] sm:$0xff]
        %v584 = vld [vmem:[%s554 + $0xe8] sm:$0xff]
        %v585 = vld [vmem:[%s554 + $0xf0] sm:$0xff]
        %v586 = vld [vmem:[%s554 + $0xf8] sm:$0xff]
        %v587 = vld [vmem:[%s554 + $0x100] sm:$0xff]
        %v588 = vld [vmem:[%s554 + $0x108] sm:$0xff]
        %v589 = vld [vmem:[%s554 + $0x110] sm:$0xff]
        %v590 = vld [vmem:[%s554 + $0x118] sm:$0xff]
        %v591 = vld [vmem:[%s554 + $0x120] sm:$0xff]
        %v592 = vld [vmem:[%s554 + $0x128] sm:$0xff]
        %v593 = vld [vmem:[%s554 + $0x130] sm:$0xff]
        %v594 = vld [vmem:[%s554 + $0x138] sm:$0xff]
        %v595 = vld [vmem:[%s554 + $0x140] sm:$0xff]
        %v596 = vld [vmem:[%s554 + $0x148] sm:$0xff]
        %v597 = vld [vmem:[%s554 + $0x150] sm:$0xff]
        %v598 = vld [vmem:[%s554 + $0x158] sm:$0xff]
        %v599 = vld [vmem:[%s554 + $0x160] sm:$0xff]
        %v600 = vld [vmem:[%s554 + $0x168] sm:$0xff]
        %v601 = vld [vmem:[%s554 + $0x170] sm:$0xff]
        %v602 = vld [vmem:[%s554 + $0x178] sm:$0xff]
        %v603 = vld [vmem:[%s554 + $0x180] sm:$0xff]
        %v604 = vld [vmem:[%s554 + $0x188] sm:$0xff]
        %v605 = vld [vmem:[%s554 + $0x190] sm:$0xff]
        %v606 = vld [vmem:[%s554 + $0x198] sm:$0xff]
        %v607 = vld [vmem:[%s554 + $0x1a0] sm:$0xff]
        %v608 = vld [vmem:[%s554 + $0x1a8] sm:$0xff]
        %v609 = vld [vmem:[%s554 + $0x1b0] sm:$0xff]
        %v610 = vld [vmem:[%s554 + $0x1b8] sm:$0xff]
        %v611 = vld [vmem:[%s554 + $0x1c0] sm:$0xff]
        %v612 = vld [vmem:[%s554 + $0x1c8] sm:$0xff]
        %v613 = vld [vmem:[%s554 + $0x1d0] sm:$0xff]
        %v614 = vld [vmem:[%s554 + $0x1d8] sm:$0xff]
        %v615 = vld [vmem:[%s554 + $0x1e0] sm:$0xff]
        %v616 = vld [vmem:[%s554 + $0x1e8] sm:$0xff]
        %v617 = vld [vmem:[%s554 + $0x1f0] sm:$0xff]
        %v618 = vld [vmem:[%s554 + $0x1f8] sm:$0xff]
        %v619 = vld [vmem:[#allocation3] sm:$0xff]
        %v620 = vld [vmem:[#allocation4] sm:$0xff]
        %v621 = vld [vmem:[#allocation2] sm:$0xff]
        %v622 = vld [vmem:[#allocation2 + $0x8] sm:$0xff]
        %v623 = vld [vmem:[#allocation2 + $0x10] sm:$0xff]
        %v624 = vld [vmem:[#allocation2 + $0x18] sm:$0xff]
        %625 = vmatprep.subr.mxu0 %v556
        %626 = vmatpush1.msra.mxu0 %v555
        %627 = vmatprep.subr.mxu0 %v560
        %628 = vmatpush1.msra.mxu0 %v559
        %629 = vmatprep.subr.mxu0 %v564
        %630 = vmatpush1.msra.mxu0 %v563
        %631 = vmatprep.subr.mxu0 %v568
        %632 = vmatpush1.msra.mxu0 %v567
        %633 = vmatprep.subr.mxu0 %v572
        %634 = vmatpush1.msra.mxu0 %v571
        %635 = vmatprep.subr.mxu0 %v576
        %636 = vmatpush1.msra.mxu0 %v575
        %637 = vmatprep.subr.mxu0 %v580
        %638 = vmatpush1.msra.mxu0 %v579
        %639 = vmatprep.subr.mxu0 %v584
        %640 = vmatpush1.msra.mxu0 %v583
        %641 = vmatprep.subr.mxu0 %v588
        %642 = vmatpush1.msra.mxu0 %v587
        %643 = vmatprep.subr.mxu0 %v592
        %644 = vmatpush1.msra.mxu0 %v591
        %645 = vmatprep.subr.mxu0 %v596
        %646 = vmatpush1.msra.mxu0 %v595
        %647 = vmatprep.subr.mxu0 %v600
        %648 = vmatpush1.msra.mxu0 %v599
        %649 = vmatprep.subr.mxu0 %v604
        %650 = vmatpush1.msra.mxu0 %v603
        %651 = vmatprep.subr.mxu0 %v608
        %652 = vmatpush1.msra.mxu0 %v607
        %653 = vmatprep.subr.mxu0 %v612
        %654 = vmatpush1.msra.mxu0 %v611
        %655 = vmatprep.subr.mxu0 %v616
        %656 = vmatpush1.msra.mxu0 %v615
        %657 = vmatprep.subr.mxu0 0.0
        %658 = vmatpush1.msra.mxu0 0.0
        %659 = vmatprep.subr.mxu0 0.0
        %660 = vmatpush1.msra.mxu0 0.0
        %661 = vmatprep.subr.mxu0 0.0
        %662 = vmatpush1.msra.mxu0 0.0
        %663 = vmatprep.subr.mxu0 0.0
        %664 = vmatpush1.msra.mxu0 0.0
        %665 = vmatprep.subr.mxu0 0.0
        %666 = vmatpush1.msra.mxu0 0.0
        %667 = vmatprep.subr.mxu0 0.0
        %668 = vmatpush1.msra.mxu0 0.0
        %669 = vmatprep.subr.mxu0 0.0
        %670 = vmatpush1.msra.mxu0 0.0
        %671 = vmatprep.subr.mxu0 0.0
        %672 = vmatpush1.msra.mxu0 0.0
        %673 = vmatprep.subr.mxu0 0.0
        %674 = vmatpush1.msra.mxu0 0.0
        %675 = vmatprep.subr.mxu0 0.0
        %676 = vmatpush1.msra.mxu0 0.0
        %677 = vmatprep.subr.mxu0 0.0
        %678 = vmatpush1.msra.mxu0 0.0
        %679 = vmatprep.subr.mxu0 0.0
        %680 = vmatpush1.msra.mxu0 0.0
        %681 = vmatprep.subr.mxu0 0.0
        %682 = vmatpush1.msra.mxu0 0.0
        %683 = vmatprep.subr.mxu0 0.0
        %684 = vmatpush1.msra.mxu0 0.0
        %685 = vmatprep.subr.mxu0 0.0
        %686 = vmatpush1.msra.mxu0 0.0
        %687 = vmatprep.subr.mxu0 0.0
        %688 = vmatpush1.msra.mxu0 0.0
        %689 = vmatprep.mubr.f32.mxu0 0.0
        %690 = vmatmul.mubr.f32.gmra.mrb[0].mxu0 %v619
        %v691 = vpop.f32.mrb[0].mxu0
        %v692 = vadd.f32 0.0, %v691
        %v693 = vpop.f32.mrb[0].mxu0
        %v694 = vadd.f32 0.0, %v693
        %695 = vdwg.mxu0
        %696 = vmatprep.subr.mxu0 %v558
        %697 = vmatpush1.msra.mxu0 %v557
        %698 = vmatprep.subr.mxu0 %v562
        %699 = vmatpush1.msra.mxu0 %v561
        %700 = vmatprep.subr.mxu0 %v566
        %701 = vmatpush1.msra.mxu0 %v565
        %702 = vmatprep.subr.mxu0 %v570
        %703 = vmatpush1.msra.mxu0 %v569
        %704 = vmatprep.subr.mxu0 %v574
        %705 = vmatpush1.msra.mxu0 %v573
        %706 = vmatprep.subr.mxu0 %v578
        %707 = vmatpush1.msra.mxu0 %v577
        %708 = vmatprep.subr.mxu0 %v582
        %709 = vmatpush1.msra.mxu0 %v581
        %710 = vmatprep.subr.mxu0 %v586
        %711 = vmatpush1.msra.mxu0 %v585
        %712 = vmatprep.subr.mxu0 %v590
        %713 = vmatpush1.msra.mxu0 %v589
        %714 = vmatprep.subr.mxu0 %v594
        %715 = vmatpush1.msra.mxu0 %v593
        %716 = vmatprep.subr.mxu0 %v598
        %717 = vmatpush1.msra.mxu0 %v597
        %718 = vmatprep.subr.mxu0 %v602
        %719 = vmatpush1.msra.mxu0 %v601
        %720 = vmatprep.subr.mxu0 %v606
        %721 = vmatpush1.msra.mxu0 %v605
        %722 = vmatprep.subr.mxu0 %v610
        %723 = vmatpush1.msra.mxu0 %v609
        %724 = vmatprep.subr.mxu0 %v614
        %725 = vmatpush1.msra.mxu0 %v613
        %726 = vmatprep.subr.mxu0 %v618
        %727 = vmatpush1.msra.mxu0 %v617
        %728 = vmatprep.subr.mxu0 0.0
        %729 = vmatpush1.msra.mxu0 0.0
        %730 = vmatprep.subr.mxu0 0.0
        %731 = vmatpush1.msra.mxu0 0.0
        %732 = vmatprep.subr.mxu0 0.0
        %733 = vmatpush1.msra.mxu0 0.0
        %734 = vmatprep.subr.mxu0 0.0
        %735 = vmatpush1.msra.mxu0 0.0
        %736 = vmatprep.subr.mxu0 0.0
        %737 = vmatpush1.msra.mxu0 0.0
        %738 = vmatprep.subr.mxu0 0.0
        %739 = vmatpush1.msra.mxu0 0.0
        %740 = vmatprep.subr.mxu0 0.0
        %741 = vmatpush1.msra.mxu0 0.0
        %742 = vmatprep.subr.mxu0 0.0
        %743 = vmatpush1.msra.mxu0 0.0
        %744 = vmatprep.subr.mxu0 0.0
        %745 = vmatpush1.msra.mxu0 0.0
        %746 = vmatprep.subr.mxu0 0.0
        %747 = vmatpush1.msra.mxu0 0.0
        %748 = vmatprep.subr.mxu0 0.0
        %749 = vmatpush1.msra.mxu0 0.0
        %750 = vmatprep.subr.mxu0 0.0
        %751 = vmatpush1.msra.mxu0 0.0
        %752 = vmatprep.subr.mxu0 0.0
        %753 = vmatpush1.msra.mxu0 0.0
        %754 = vmatprep.subr.mxu0 0.0
        %755 = vmatpush1.msra.mxu0 0.0
        %756 = vmatprep.subr.mxu0 0.0
        %757 = vmatpush1.msra.mxu0 0.0
        %758 = vmatprep.subr.mxu0 0.0
        %759 = vmatpush1.msra.mxu0 0.0
        %760 = vmatprep.mubr.f32.mxu0 0.0
        %761 = vmatmul.mubr.f32.gmra.mrb[0].mxu0 %v619
        %v762 = vpop.f32.mrb[0].mxu0
        %v763 = vadd.f32 0.0, %v762
        %v764 = vpop.f32.mrb[0].mxu0
        %v765 = vadd.f32 0.0, %v764
        %766 = vdwg.mxu0
        %v767 = vadd.f32 %v621, %v692
        %v768 = vadd.f32 %v622, %v694
        %v769 = vadd.f32 %v623, %v763
        %v770 = vadd.f32 %v624, %v765
        %v771 = vxor.u32 %v768, 2147483648
        %v772 = vmul.f32 %v771, 1.442695
        %v773 = vpow.pop %v772
        %v774 = vadd.f32 %v773, 1.0
        %v775 = vrcp.pop %v774
        %v776 = vmul.f32 1.0, %v775
        %v777 = vmul.f32 %v620, %v776
        %v778 = vtanh.pop %v769
        %v779 = vxor.u32 %v767, 2147483648
        %v780 = vmul.f32 %v779, 1.442695
        %v781 = vpow.pop %v780
        %v782 = vadd.f32 %v781, 1.0
        %v783 = vrcp.pop %v782
        %v784 = vmul.f32 1.0, %v783
        %v785 = vmul.f32 %v778, %v784
        %v786 = vadd.f32 %v777, %v785
        %v787 = vxor.u32 %v770, 2147483648
        %v788 = vmul.f32 %v787, 1.442695
        %v789 = vpow.pop %v788
        %v790 = vadd.f32 %v789, 1.0
        %v791 = vrcp.pop %v790
        %v792 = vmul.f32 1.0, %v791
        %v793 = vtanh.pop %v786
        %v794 = vmul.f32 %v792, %v793
        %795 = vst [vmem:[%s253] sm:$0xff] %v794
        %796 = vst [vmem:[%s260] sm:$0xff] %v786
        %s797 = scalar_lea.vmem [#allocation2], 32
        %v798 = vld [vmem:[%s797] sm:$0xff]
        %v799 = vld [vmem:[%s797 + $0x8] sm:$0xff]
        %v800 = vld [vmem:[%s797 + $0x10] sm:$0xff]
        %v801 = vld [vmem:[%s797 + $0x18] sm:$0xff]
        %802 = vmatprep.subr.mxu0 %v556
        %803 = vmatpush1.msra.mxu0 %v555
        %804 = vmatprep.subr.mxu0 %v560
        %805 = vmatpush1.msra.mxu0 %v559
        %806 = vmatprep.subr.mxu0 %v564
        %807 = vmatpush1.msra.mxu0 %v563
        %808 = vmatprep.subr.mxu0 %v568
        %809 = vmatpush1.msra.mxu0 %v567
        %810 = vmatprep.subr.mxu0 %v572
        %811 = vmatpush1.msra.mxu0 %v571
        %812 = vmatprep.subr.mxu0 %v576
        %813 = vmatpush1.msra.mxu0 %v575
        %814 = vmatprep.subr.mxu0 %v580
        %815 = vmatpush1.msra.mxu0 %v579
        %816 = vmatprep.subr.mxu0 %v584
        %817 = vmatpush1.msra.mxu0 %v583
        %818 = vmatprep.subr.mxu0 %v588
        %819 = vmatpush1.msra.mxu0 %v587
        %820 = vmatprep.subr.mxu0 %v592
        %821 = vmatpush1.msra.mxu0 %v591
        %822 = vmatprep.subr.mxu0 %v596
        %823 = vmatpush1.msra.mxu0 %v595
        %824 = vmatprep.subr.mxu0 %v600
        %825 = vmatpush1.msra.mxu0 %v599
        %826 = vmatprep.subr.mxu0 %v604
        %827 = vmatpush1.msra.mxu0 %v603
        %828 = vmatprep.subr.mxu0 %v608
        %829 = vmatpush1.msra.mxu0 %v607
        %830 = vmatprep.subr.mxu0 %v612
        %831 = vmatpush1.msra.mxu0 %v611
        %832 = vmatprep.subr.mxu0 %v616
        %833 = vmatpush1.msra.mxu0 %v615
        %834 = vmatprep.subr.mxu0 0.0
        %835 = vmatpush1.msra.mxu0 0.0
        %836 = vmatprep.subr.mxu0 0.0
        %837 = vmatpush1.msra.mxu0 0.0
        %838 = vmatprep.subr.mxu0 0.0
        %839 = vmatpush1.msra.mxu0 0.0
        %840 = vmatprep.subr.mxu0 0.0
        %841 = vmatpush1.msra.mxu0 0.0
        %842 = vmatprep.subr.mxu0 0.0
        %843 = vmatpush1.msra.mxu0 0.0
        %844 = vmatprep.subr.mxu0 0.0
        %845 = vmatpush1.msra.mxu0 0.0
        %846 = vmatprep.subr.mxu0 0.0
        %847 = vmatpush1.msra.mxu0 0.0
        %848 = vmatprep.subr.mxu0 0.0
        %849 = vmatpush1.msra.mxu0 0.0
        %850 = vmatprep.subr.mxu0 0.0
        %851 = vmatpush1.msra.mxu0 0.0
        %852 = vmatprep.subr.mxu0 0.0
        %853 = vmatpush1.msra.mxu0 0.0
        %854 = vmatprep.subr.mxu0 0.0
        %855 = vmatpush1.msra.mxu0 0.0
        %856 = vmatprep.subr.mxu0 0.0
        %857 = vmatpush1.msra.mxu0 0.0
        %858 = vmatprep.subr.mxu0 0.0
        %859 = vmatpush1.msra.mxu0 0.0
        %860 = vmatprep.subr.mxu0 0.0
        %861 = vmatpush1.msra.mxu0 0.0
        %862 = vmatprep.subr.mxu0 0.0
        %863 = vmatpush1.msra.mxu0 0.0
        %864 = vmatprep.subr.mxu0 0.0
        %865 = vmatpush1.msra.mxu0 0.0
        %866 = vmatprep.mubr.f32.mxu0 0.0
        %867 = vmatmul.mubr.f32.gmra.mrb[0].mxu0 %v794
        %v868 = vpop.f32.mrb[0].mxu0
        %v869 = vadd.f32 0.0, %v868
        %v870 = vpop.f32.mrb[0].mxu0
        %v871 = vadd.f32 0.0, %v870
        %872 = vdwg.mxu0
        %873 = vmatprep.subr.mxu0 %v558
        %874 = vmatpush1.msra.mxu0 %v557
        %875 = vmatprep.subr.mxu0 %v562
        %876 = vmatpush1.msra.mxu0 %v561
        %877 = vmatprep.subr.mxu0 %v566
        %878 = vmatpush1.msra.mxu0 %v565
        %879 = vmatprep.subr.mxu0 %v570
        %880 = vmatpush1.msra.mxu0 %v569
        %881 = vmatprep.subr.mxu0 %v574
        %882 = vmatpush1.msra.mxu0 %v573
        %883 = vmatprep.subr.mxu0 %v578
        %884 = vmatpush1.msra.mxu0 %v577
        %885 = vmatprep.subr.mxu0 %v582
        %886 = vmatpush1.msra.mxu0 %v581
        %887 = vmatprep.subr.mxu0 %v586
        %888 = vmatpush1.msra.mxu0 %v585
        %889 = vmatprep.subr.mxu0 %v590
        %890 = vmatpush1.msra.mxu0 %v589
        %891 = vmatprep.subr.mxu0 %v594
        %892 = vmatpush1.msra.mxu0 %v593
        %893 = vmatprep.subr.mxu0 %v598
        %894 = vmatpush1.msra.mxu0 %v597
        %895 = vmatprep.subr.mxu0 %v602
        %896 = vmatpush1.msra.mxu0 %v601
        %897 = vmatprep.subr.mxu0 %v606
        %898 = vmatpush1.msra.mxu0 %v605
        %899 = vmatprep.subr.mxu0 %v610
        %900 = vmatpush1.msra.mxu0 %v609
        %901 = vmatprep.subr.mxu0 %v614
        %902 = vmatpush1.msra.mxu0 %v613
        %903 = vmatprep.subr.mxu0 %v618
        %904 = vmatpush1.msra.mxu0 %v617
        %905 = vmatprep.subr.mxu0 0.0
        %906 = vmatpush1.msra.mxu0 0.0
        %907 = vmatprep.subr.mxu0 0.0
        %908 = vmatpush1.msra.mxu0 0.0
        %909 = vmatprep.subr.mxu0 0.0
        %910 = vmatpush1.msra.mxu0 0.0
        %911 = vmatprep.subr.mxu0 0.0
        %912 = vmatpush1.msra.mxu0 0.0
        %913 = vmatprep.subr.mxu0 0.0
        %914 = vmatpush1.msra.mxu0 0.0
        %915 = vmatprep.subr.mxu0 0.0
        %916 = vmatpush1.msra.mxu0 0.0
        %917 = vmatprep.subr.mxu0 0.0
        %918 = vmatpush1.msra.mxu0 0.0
        %919 = vmatprep.subr.mxu0 0.0
        %920 = vmatpush1.msra.mxu0 0.0
        %921 = vmatprep.subr.mxu0 0.0
        %922 = vmatpush1.msra.mxu0 0.0
        %923 = vmatprep.subr.mxu0 0.0
        %924 = vmatpush1.msra.mxu0 0.0
        %925 = vmatprep.subr.mxu0 0.0
        %926 = vmatpush1.msra.mxu0 0.0
        %927 = vmatprep.subr.mxu0 0.0
        %928 = vmatpush1.msra.mxu0 0.0
        %929 = vmatprep.subr.mxu0 0.0
        %930 = vmatpush1.msra.mxu0 0.0
        %931 = vmatprep.subr.mxu0 0.0
        %932 = vmatpush1.msra.mxu0 0.0
        %933 = vmatprep.subr.mxu0 0.0
        %934 = vmatpush1.msra.mxu0 0.0
        %935 = vmatprep.subr.mxu0 0.0
        %936 = vmatpush1.msra.mxu0 0.0
        %937 = vmatprep.mubr.f32.mxu0 0.0
        %938 = vmatmul.mubr.f32.gmra.mrb[0].mxu0 %v794
        %v939 = vpop.f32.mrb[0].mxu0
        %v940 = vadd.f32 0.0, %v939
        %v941 = vpop.f32.mrb[0].mxu0
        %v942 = vadd.f32 0.0, %v941
        %943 = vdwg.mxu0
        %v944 = vadd.f32 %v798, %v869
        %v945 = vadd.f32 %v799, %v871
        %v946 = vadd.f32 %v800, %v940
        %v947 = vadd.f32 %v801, %v942
        %v948 = vxor.u32 %v945, 2147483648
        %v949 = vmul.f32 %v948, 1.442695
        %v950 = vpow.pop %v949
        %v951 = vadd.f32 %v950, 1.0
        %v952 = vrcp.pop %v951
        %v953 = vmul.f32 1.0, %v952
        %v954 = vmul.f32 %v786, %v953
        %v955 = vtanh.pop %v946
        %v956 = vxor.u32 %v944, 2147483648
        %v957 = vmul.f32 %v956, 1.442695
        %v958 = vpow.pop %v957
        %v959 = vadd.f32 %v958, 1.0
        %v960 = vrcp.pop %v959
        %v961 = vmul.f32 1.0, %v960
        %v962 = vmul.f32 %v955, %v961
        %v963 = vadd.f32 %v954, %v962
        %v964 = vxor.u32 %v947, 2147483648
        %v965 = vmul.f32 %v964, 1.442695
        %v966 = vpow.pop %v965
        %v967 = vadd.f32 %v966, 1.0
        %v968 = vrcp.pop %v967
        %v969 = vmul.f32 1.0, %v968
        %v970 = vtanh.pop %v963
        %v971 = vmul.f32 %v969, %v970
        %s972 = scalar_lea.vmem %s253, 8 [#allocation10]
        %973 = vst [vmem:[%s972] sm:$0xff] %v971
        %s974 = scalar_lea.vmem %s260, 8 [#allocation11]
        %975 = vst [vmem:[%s974] sm:$0xff] %v963
        %s976 = scalar_lea.vmem [#allocation2], 64
        %v977 = vld [vmem:[%s976] sm:$0xff]
        %v978 = vld [vmem:[%s976 + $0x8] sm:$0xff]
        %v979 = vld [vmem:[%s976 + $0x10] sm:$0xff]
        %v980 = vld [vmem:[%s976 + $0x18] sm:$0xff]
        %981 = vmatprep.subr.mxu0 %v556
        %982 = vmatpush1.msra.mxu0 %v555
        %983 = vmatprep.subr.mxu0 %v560
        %984 = vmatpush1.msra.mxu0 %v559
        %985 = vmatprep.subr.mxu0 %v564
        %986 = vmatpush1.msra.mxu0 %v563
        %987 = vmatprep.subr.mxu0 %v568
        %988 = vmatpush1.msra.mxu0 %v567
        %989 = vmatprep.subr.mxu0 %v572
        %990 = vmatpush1.msra.mxu0 %v571
        %991 = vmatprep.subr.mxu0 %v576
        %992 = vmatpush1.msra.mxu0 %v575
        %993 = vmatprep.subr.mxu0 %v580
        %994 = vmatpush1.msra.mxu0 %v579
        %995 = vmatprep.subr.mxu0 %v584
        %996 = vmatpush1.msra.mxu0 %v583
        %997 = vmatprep.subr.mxu0 %v588
        %998 = vmatpush1.msra.mxu0 %v587
        %999 = vmatprep.subr.mxu0 %v592
        %1000 = vmatpush1.msra.mxu0 %v591
        %1001 = vmatprep.subr.mxu0 %v596
        %1002 = vmatpush1.msra.mxu0 %v595
        %1003 = vmatprep.subr.mxu0 %v600
        %1004 = vmatpush1.msra.mxu0 %v599
        %1005 = vmatprep.subr.mxu0 %v604
        %1006 = vmatpush1.msra.mxu0 %v603
        %1007 = vmatprep.subr.mxu0 %v608
        %1008 = vmatpush1.msra.mxu0 %v607
        %1009 = vmatprep.subr.mxu0 %v612
        %1010 = vmatpush1.msra.mxu0 %v611
        %1011 = vmatprep.subr.mxu0 %v616
        %1012 = vmatpush1.msra.mxu0 %v615
        %1013 = vmatprep.subr.mxu0 0.0
        %1014 = vmatpush1.msra.mxu0 0.0
        %1015 = vmatprep.subr.mxu0 0.0
        %1016 = vmatpush1.msra.mxu0 0.0
        %1017 = vmatprep.subr.mxu0 0.0
        %1018 = vmatpush1.msra.mxu0 0.0
        %1019 = vmatprep.subr.mxu0 0.0
        %1020 = vmatpush1.msra.mxu0 0.0
        %1021 = vmatprep.subr.mxu0 0.0
        %1022 = vmatpush1.msra.mxu0 0.0
        %1023 = vmatprep.subr.mxu0 0.0
        %1024 = vmatpush1.msra.mxu0 0.0
        %1025 = vmatprep.subr.mxu0 0.0
        %1026 = vmatpush1.msra.mxu0 0.0
        %1027 = vmatprep.subr.mxu0 0.0
        %1028 = vmatpush1.msra.mxu0 0.0
        %1029 = vmatprep.subr.mxu0 0.0
        %1030 = vmatpush1.msra.mxu0 0.0
        %1031 = vmatprep.subr.mxu0 0.0
        %1032 = vmatpush1.msra.mxu0 0.0
        %1033 = vmatprep.subr.mxu0 0.0
        %1034 = vmatpush1.msra.mxu0 0.0
        %1035 = vmatprep.subr.mxu0 0.0
        %1036 = vmatpush1.msra.mxu0 0.0
        %1037 = vmatprep.subr.mxu0 0.0
        %1038 = vmatpush1.msra.mxu0 0.0
        %1039 = vmatprep.subr.mxu0 0.0
        %1040 = vmatpush1.msra.mxu0 0.0
        %1041 = vmatprep.subr.mxu0 0.0
        %1042 = vmatpush1.msra.mxu0 0.0
        %1043 = vmatprep.subr.mxu0 0.0
        %1044 = vmatpush1.msra.mxu0 0.0
        %1045 = vmatprep.mubr.f32.mxu0 0.0
        %1046 = vmatmul.mubr.f32.gmra.mrb[0].mxu0 %v971
        %v1047 = vpop.f32.mrb[0].mxu0
        %v1048 = vadd.f32 0.0, %v1047
        %v1049 = vpop.f32.mrb[0].mxu0
        %v1050 = vadd.f32 0.0, %v1049
        %1051 = vdwg.mxu0
        %1052 = vmatprep.subr.mxu0 %v558
        %1053 = vmatpush1.msra.mxu0 %v557
        %1054 = vmatprep.subr.mxu0 %v562
        %1055 = vmatpush1.msra.mxu0 %v561
        %1056 = vmatprep.subr.mxu0 %v566
        %1057 = vmatpush1.msra.mxu0 %v565
        %1058 = vmatprep.subr.mxu0 %v570
        %1059 = vmatpush1.msra.mxu0 %v569
        %1060 = vmatprep.subr.mxu0 %v574
        %1061 = vmatpush1.msra.mxu0 %v573
        %1062 = vmatprep.subr.mxu0 %v578
        %1063 = vmatpush1.msra.mxu0 %v577
        %1064 = vmatprep.subr.mxu0 %v582
        %1065 = vmatpush1.msra.mxu0 %v581
        %1066 = vmatprep.subr.mxu0 %v586
        %1067 = vmatpush1.msra.mxu0 %v585
        %1068 = vmatprep.subr.mxu0 %v590
        %1069 = vmatpush1.msra.mxu0 %v589
        %1070 = vmatprep.subr.mxu0 %v594
        %1071 = vmatpush1.msra.mxu0 %v593
        %1072 = vmatprep.subr.mxu0 %v598
        %1073 = vmatpush1.msra.mxu0 %v597
        %1074 = vmatprep.subr.mxu0 %v602
        %1075 = vmatpush1.msra.mxu0 %v601
        %1076 = vmatprep.subr.mxu0 %v606
        %1077 = vmatpush1.msra.mxu0 %v605
        %1078 = vmatprep.subr.mxu0 %v610
        %1079 = vmatpush1.msra.mxu0 %v609
        %1080 = vmatprep.subr.mxu0 %v614
        %1081 = vmatpush1.msra.mxu0 %v613
        %1082 = vmatprep.subr.mxu0 %v618
        %1083 = vmatpush1.msra.mxu0 %v617
        %1084 = vmatprep.subr.mxu0 0.0
        %1085 = vmatpush1.msra.mxu0 0.0
        %1086 = vmatprep.subr.mxu0 0.0
        %1087 = vmatpush1.msra.mxu0 0.0
        %1088 = vmatprep.subr.mxu0 0.0
        %1089 = vmatpush1.msra.mxu0 0.0
        %1090 = vmatprep.subr.mxu0 0.0
        %1091 = vmatpush1.msra.mxu0 0.0
        %1092 = vmatprep.subr.mxu0 0.0
        %1093 = vmatpush1.msra.mxu0 0.0
        %1094 = vmatprep.subr.mxu0 0.0
        %1095 = vmatpush1.msra.mxu0 0.0
        %1096 = vmatprep.subr.mxu0 0.0
        %1097 = vmatpush1.msra.mxu0 0.0
        %1098 = vmatprep.subr.mxu0 0.0
        %1099 = vmatpush1.msra.mxu0 0.0
        %1100 = vmatprep.subr.mxu0 0.0
        %1101 = vmatpush1.msra.mxu0 0.0
        %1102 = vmatprep.subr.mxu0 0.0
        %1103 = vmatpush1.msra.mxu0 0.0
        %1104 = vmatprep.subr.mxu0 0.0
        %1105 = vmatpush1.msra.mxu0 0.0
        %1106 = vmatprep.subr.mxu0 0.0
        %1107 = vmatpush1.msra.mxu0 0.0
        %1108 = vmatprep.subr.mxu0 0.0
        %1109 = vmatpush1.msra.mxu0 0.0
        %1110 = vmatprep.subr.mxu0 0.0
        %1111 = vmatpush1.msra.mxu0 0.0
        %1112 = vmatprep.subr.mxu0 0.0
        %1113 = vmatpush1.msra.mxu0 0.0
        %1114 = vmatprep.subr.mxu0 0.0
        %1115 = vmatpush1.msra.mxu0 0.0
        %1116 = vmatprep.mubr.f32.mxu0 0.0
        %1117 = vmatmul.mubr.f32.gmra.mrb[0].mxu0 %v971
        %v1118 = vpop.f32.mrb[0].mxu0
        %v1119 = vadd.f32 0.0, %v1118
        %v1120 = vpop.f32.mrb[0].mxu0
        %v1121 = vadd.f32 0.0, %v1120
        %1122 = vdwg.mxu0
        %v1123 = vadd.f32 %v977, %v1048
        %v1124 = vadd.f32 %v978, %v1050
        %v1125 = vadd.f32 %v979, %v1119
        %v1126 = vadd.f32 %v980, %v1121
        %v1127 = vxor.u32 %v1124, 2147483648
        %v1128 = vmul.f32 %v1127, 1.442695
        %v1129 = vpow.pop %v1128
        %v1130 = vadd.f32 %v1129, 1.0
        %v1131 = vrcp.pop %v1130
        %v1132 = vmul.f32 1.0, %v1131
        %v1133 = vmul.f32 %v963, %v1132
        %v1134 = vtanh.pop %v1125
        %v1135 = vxor.u32 %v1123, 2147483648
        %v1136 = vmul.f32 %v1135, 1.442695
        %v1137 = vpow.pop %v1136
        %v1138 = vadd.f32 %v1137, 1.0
        %v1139 = vrcp.pop %v1138
        %v1140 = vmul.f32 1.0, %v1139
        %v1141 = vmul.f32 %v1134, %v1140
        %v1142 = vadd.f32 %v1133, %v1141
        %v1143 = vxor.u32 %v1126, 2147483648
        %v1144 = vmul.f32 %v1143, 1.442695
        %v1145 = vpow.pop %v1144
        %v1146 = vadd.f32 %v1145, 1.0
        %v1147 = vrcp.pop %v1146
        %v1148 = vmul.f32 1.0, %v1147
        %v1149 = vtanh.pop %v1142
        %v1150 = vmul.f32 %v1148, %v1149
        %s1151 = scalar_lea.vmem %s253, 16 [#allocation10]
        %1152 = vst [vmem:[%s1151] sm:$0xff] %v1150
        %s1153 = scalar_lea.vmem %s260, 16 [#allocation11]
        %1154 = vst [vmem:[%s1153] sm:$0xff] %v1142
        %s1155 = scalar_lea.vmem [#allocation2], 96
        %v1156 = vld [vmem:[%s1155] sm:$0xff]
        %v1157 = vld [vmem:[%s1155 + $0x8] sm:$0xff]
        %v1158 = vld [vmem:[%s1155 + $0x10] sm:$0xff]
        %v1159 = vld [vmem:[%s1155 + $0x18] sm:$0xff]
        %1160 = vmatprep.subr.mxu0 %v556
        %1161 = vmatpush1.msra.mxu0 %v555
        %1162 = vmatprep.subr.mxu0 %v560
        %1163 = vmatpush1.msra.mxu0 %v559
        %1164 = vmatprep.subr.mxu0 %v564
        %1165 = vmatpush1.msra.mxu0 %v563
        %1166 = vmatprep.subr.mxu0 %v568
        %1167 = vmatpush1.msra.mxu0 %v567
        %1168 = vmatprep.subr.mxu0 %v572
        %1169 = vmatpush1.msra.mxu0 %v571
        %1170 = vmatprep.subr.mxu0 %v576
        %1171 = vmatpush1.msra.mxu0 %v575
        %1172 = vmatprep.subr.mxu0 %v580
        %1173 = vmatpush1.msra.mxu0 %v579
        %1174 = vmatprep.subr.mxu0 %v584
        %1175 = vmatpush1.msra.mxu0 %v583
        %1176 = vmatprep.subr.mxu0 %v588
        %1177 = vmatpush1.msra.mxu0 %v587
        %1178 = vmatprep.subr.mxu0 %v592
        %1179 = vmatpush1.msra.mxu0 %v591
        %1180 = vmatprep.subr.mxu0 %v596
        %1181 = vmatpush1.msra.mxu0 %v595
        %1182 = vmatprep.subr.mxu0 %v600
        %1183 = vmatpush1.msra.mxu0 %v599
        %1184 = vmatprep.subr.mxu0 %v604
        %1185 = vmatpush1.msra.mxu0 %v603
        %1186 = vmatprep.subr.mxu0 %v608
        %1187 = vmatpush1.msra.mxu0 %v607
        %1188 = vmatprep.subr.mxu0 %v612
        %1189 = vmatpush1.msra.mxu0 %v611
        %1190 = vmatprep.subr.mxu0 %v616
        %1191 = vmatpush1.msra.mxu0 %v615
        %1192 = vmatprep.subr.mxu0 0.0
        %1193 = vmatpush1.msra.mxu0 0.0
        %1194 = vmatprep.subr.mxu0 0.0
        %1195 = vmatpush1.msra.mxu0 0.0
        %1196 = vmatprep.subr.mxu0 0.0
        %1197 = vmatpush1.msra.mxu0 0.0
        %1198 = vmatprep.subr.mxu0 0.0
        %1199 = vmatpush1.msra.mxu0 0.0
        %1200 = vmatprep.subr.mxu0 0.0
        %1201 = vmatpush1.msra.mxu0 0.0
        %1202 = vmatprep.subr.mxu0 0.0
        %1203 = vmatpush1.msra.mxu0 0.0
        %1204 = vmatprep.subr.mxu0 0.0
        %1205 = vmatpush1.msra.mxu0 0.0
        %1206 = vmatprep.subr.mxu0 0.0
        %1207 = vmatpush1.msra.mxu0 0.0
        %1208 = vmatprep.subr.mxu0 0.0
        %1209 = vmatpush1.msra.mxu0 0.0
        %1210 = vmatprep.subr.mxu0 0.0
        %1211 = vmatpush1.msra.mxu0 0.0
        %1212 = vmatprep.subr.mxu0 0.0
        %1213 = vmatpush1.msra.mxu0 0.0
        %1214 = vmatprep.subr.mxu0 0.0
        %1215 = vmatpush1.msra.mxu0 0.0
        %1216 = vmatprep.subr.mxu0 0.0
        %1217 = vmatpush1.msra.mxu0 0.0
        %1218 = vmatprep.subr.mxu0 0.0
        %1219 = vmatpush1.msra.mxu0 0.0
        %1220 = vmatprep.subr.mxu0 0.0
        %1221 = vmatpush1.msra.mxu0 0.0
        %1222 = vmatprep.subr.mxu0 0.0
        %1223 = vmatpush1.msra.mxu0 0.0
        %1224 = vmatprep.mubr.f32.mxu0 0.0
        %1225 = vmatmul.mubr.f32.gmra.mrb[0].mxu0 %v1150
        %v1226 = vpop.f32.mrb[0].mxu0
        %v1227 = vadd.f32 0.0, %v1226
        %v1228 = vpop.f32.mrb[0].mxu0
        %v1229 = vadd.f32 0.0, %v1228
        %1230 = vdwg.mxu0
        %1231 = vmatprep.subr.mxu0 %v558
        %1232 = vmatpush1.msra.mxu0 %v557
        %1233 = vmatprep.subr.mxu0 %v562
        %1234 = vmatpush1.msra.mxu0 %v561
        %1235 = vmatprep.subr.mxu0 %v566
        %1236 = vmatpush1.msra.mxu0 %v565
        %1237 = vmatprep.subr.mxu0 %v570
        %1238 = vmatpush1.msra.mxu0 %v569
        %1239 = vmatprep.subr.mxu0 %v574
        %1240 = vmatpush1.msra.mxu0 %v573
        %1241 = vmatprep.subr.mxu0 %v578
        %1242 = vmatpush1.msra.mxu0 %v577
        %1243 = vmatprep.subr.mxu0 %v582
        %1244 = vmatpush1.msra.mxu0 %v581
        %1245 = vmatprep.subr.mxu0 %v586
        %1246 = vmatpush1.msra.mxu0 %v585
        %1247 = vmatprep.subr.mxu0 %v590
        %1248 = vmatpush1.msra.mxu0 %v589
        %1249 = vmatprep.subr.mxu0 %v594
        %1250 = vmatpush1.msra.mxu0 %v593
        %1251 = vmatprep.subr.mxu0 %v598
        %1252 = vmatpush1.msra.mxu0 %v597
        %1253 = vmatprep.subr.mxu0 %v602
        %1254 = vmatpush1.msra.mxu0 %v601
        %1255 = vmatprep.subr.mxu0 %v606
        %1256 = vmatpush1.msra.mxu0 %v605
        %1257 = vmatprep.subr.mxu0 %v610
        %1258 = vmatpush1.msra.mxu0 %v609
        %1259 = vmatprep.subr.mxu0 %v614
        %1260 = vmatpush1.msra.mxu0 %v613
        %1261 = vmatprep.subr.mxu0 %v618
        %1262 = vmatpush1.msra.mxu0 %v617
        %1263 = vmatprep.subr.mxu0 0.0
        %1264 = vmatpush1.msra.mxu0 0.0
        %1265 = vmatprep.subr.mxu0 0.0
        %1266 = vmatpush1.msra.mxu0 0.0
        %1267 = vmatprep.subr.mxu0 0.0
        %1268 = vmatpush1.msra.mxu0 0.0
        %1269 = vmatprep.subr.mxu0 0.0
        %1270 = vmatpush1.msra.mxu0 0.0
        %1271 = vmatprep.subr.mxu0 0.0
        %1272 = vmatpush1.msra.mxu0 0.0
        %1273 = vmatprep.subr.mxu0 0.0
        %1274 = vmatpush1.msra.mxu0 0.0
        %1275 = vmatprep.subr.mxu0 0.0
        %1276 = vmatpush1.msra.mxu0 0.0
        %1277 = vmatprep.subr.mxu0 0.0
        %1278 = vmatpush1.msra.mxu0 0.0
        %1279 = vmatprep.subr.mxu0 0.0
        %1280 = vmatpush1.msra.mxu0 0.0
        %1281 = vmatprep.subr.mxu0 0.0
        %1282 = vmatpush1.msra.mxu0 0.0
        %1283 = vmatprep.subr.mxu0 0.0
        %1284 = vmatpush1.msra.mxu0 0.0
        %1285 = vmatprep.subr.mxu0 0.0
        %1286 = vmatpush1.msra.mxu0 0.0
        %1287 = vmatprep.subr.mxu0 0.0
        %1288 = vmatpush1.msra.mxu0 0.0
        %1289 = vmatprep.subr.mxu0 0.0
        %1290 = vmatpush1.msra.mxu0 0.0
        %1291 = vmatprep.subr.mxu0 0.0
        %1292 = vmatpush1.msra.mxu0 0.0
        %1293 = vmatprep.subr.mxu0 0.0
        %1294 = vmatpush1.msra.mxu0 0.0
        %1295 = vmatprep.mubr.f32.mxu0 0.0
        %1296 = vmatmul.mubr.f32.gmra.mrb[0].mxu0 %v1150
        %v1297 = vpop.f32.mrb[0].mxu0
        %v1298 = vadd.f32 0.0, %v1297
        %v1299 = vpop.f32.mrb[0].mxu0
        %v1300 = vadd.f32 0.0, %v1299
        %1301 = vdwg.mxu0
        %v1302 = vadd.f32 %v1156, %v1227
        %v1303 = vadd.f32 %v1157, %v1229
        %v1304 = vadd.f32 %v1158, %v1298
        %v1305 = vadd.f32 %v1159, %v1300
        %v1306 = vxor.u32 %v1303, 2147483648
        %v1307 = vmul.f32 %v1306, 1.442695
        %v1308 = vpow.pop %v1307
        %v1309 = vadd.f32 %v1308, 1.0
        %v1310 = vrcp.pop %v1309
        %v1311 = vmul.f32 1.0, %v1310
        %v1312 = vmul.f32 %v1142, %v1311
        %v1313 = vtanh.pop %v1304
        %v1314 = vxor.u32 %v1302, 2147483648
        %v1315 = vmul.f32 %v1314, 1.442695
        %v1316 = vpow.pop %v1315
        %v1317 = vadd.f32 %v1316, 1.0
        %v1318 = vrcp.pop %v1317
        %v1319 = vmul.f32 1.0, %v1318
        %v1320 = vmul.f32 %v1313, %v1319
        %v1321 = vadd.f32 %v1312, %v1320
        %v1322 = vxor.u32 %v1305, 2147483648
        %v1323 = vmul.f32 %v1322, 1.442695
        %v1324 = vpow.pop %v1323
        %v1325 = vadd.f32 %v1324, 1.0
        %v1326 = vrcp.pop %v1325
        %v1327 = vmul.f32 1.0, %v1326
        %v1328 = vtanh.pop %v1321
        %v1329 = vmul.f32 %v1327, %v1328
        %s1330 = scalar_lea.vmem %s253, 24 [#allocation10]
        %1331 = vst [vmem:[%s1330] sm:$0xff] %v1329
        %s1332 = scalar_lea.vmem %s260, 24 [#allocation11]
        %1333 = vst [vmem:[%s1332] sm:$0xff] %v1321
        %1334 = vst [vmem:[#allocation3] sm:$0xff] %v1329
        %1335 = vst [vmem:[#allocation4] sm:$0xff] %v1321
        %s1336 = sand.u32 %s118, 1
        %s1337 = scalar_lea.sflag [#allocation7], %s1336
        %s1338 = sand.u32 %s118, 1
        %s1339 = smul.addr %s1338, 32
        %s1340 = scalar_lea.vmem [#allocation10], %s1339
        %s1341 = sand.u32 %s146, 1
        %s1342 = scalar_lea.sflag [#allocation12], %s1341
        %s1343 = sand.u32 %s146, 1
        %s1344 = smul.addr %s1343, 32
        %s1345 = scalar_lea.vmem [#allocation11], %s1344
        // Predicated region
        $region45: #{tpu_custom_call.1} parent=31 // pred_check
          %p1346 = pneg %p128
        $region46: #{tpu_custom_call.1} parent=31 // pred_check_branch
          %1348 = sbr.rel (%p1346) target = $region48
        $region47: #{tpu_custom_call.1} parent=31 // pred_region
          %s1349 = smul.u32 4, %s31
          %s1351 = ssub.s32 512, 512
          %1352 = vsyncadd %s1337, %s1351
          %s1353 = sadd.s32 %s30, %s1349
          %s1354 = smul.addr %s1353, 128
          %s1355 = scalar_lea.hbm %s3, %s1354
          %s1356 = sshll.u32 %s1340, 4
          %s1357 = int_to_ptr.vmem [resolvable:$true] %s1356
          %1362 = dma.vmem_to_hbm [thread:$0]  %s1357, 512, %s1355, %s1337, 128, 128, 8
        $region48: #{tpu_custom_call.1} parent=31 // pred_fallthru
          _
        // Predicated region
        $region49: #{tpu_custom_call.1} parent=31 // pred_check
          %p1363 = pneg %p156
        $region50: #{tpu_custom_call.1} parent=31 // pred_check_branch
          %1365 = sbr.rel (%p1363) target = $region52
        $region51: #{tpu_custom_call.1} parent=31 // pred_region
          %s1366 = smul.u32 4, %s31
          %s1368 = ssub.s32 512, 512
          %1369 = vsyncadd %s1342, %s1368
          %s1370 = sadd.s32 %s30, %s1366
          %s1371 = smul.addr %s1370, 128
          %s1372 = scalar_lea.hbm %s4, %s1371
          %s1373 = sshll.u32 %s1345, 4
          %s1374 = int_to_ptr.vmem [resolvable:$true] %s1373
          %1379 = dma.vmem_to_hbm [thread:$0]  %s1374, 512, %s1372, %s1342, 128, 128, 8
        $region52: #{tpu_custom_call.1} parent=31 // pred_fallthru
          _
      $region32: #{tpu_custom_call.1} parent=5 // pred_fallthru
        _
      %p1380 = scmp.le.s32.totalorder 2, %s21
      // Predicated region
      $region53: #{tpu_custom_call.1} parent=5 // pred_check
        %p1381 = pneg %p1380
      $region54: #{tpu_custom_call.1} parent=5 // pred_check_branch
        %1383 = sbr.rel (%p1381) target = $region56
      $region55: #{tpu_custom_call.1} parent=5 // pred_region
        %s1384 = ssub.s32 %s21, 2
        // Predicated region
        $region57: #{tpu_custom_call.1} parent=55 // pred_check
          %p1385 = pneg %p134
        $region58: #{tpu_custom_call.1} parent=55 // pred_check_branch
          %1387 = sbr.rel (%p1385) target = $region60
        $region59: #{tpu_custom_call.1} parent=55 // pred_region
          %s1388 = sand.u32 %s119, 1
          %s1389 = scalar_lea.sflag [#allocation7], %s1388
          %s1390 = sand.u32 %s119, 1
          %s1391 = smul.addr %s1390, 32
          %s1392 = scalar_lea.vmem [#allocation10], %s1391
          %1393 = dma.done %s1389, 512
        $region60: #{tpu_custom_call.1} parent=55 // pred_fallthru
          _
        // Predicated region
        $region61: #{tpu_custom_call.1} parent=55 // pred_check
          %p1394 = pneg %p162
        $region62: #{tpu_custom_call.1} parent=55 // pred_check_branch
          %1396 = sbr.rel (%p1394) target = $region64
        $region63: #{tpu_custom_call.1} parent=55 // pred_region
          %s1397 = sand.u32 %s147, 1
          %s1398 = scalar_lea.sflag [#allocation12], %s1397
          %s1399 = sand.u32 %s147, 1
          %s1400 = smul.addr %s1399, 32
          %s1401 = scalar_lea.vmem [#allocation11], %s1400
          %1402 = dma.done %s1398, 512
        $region64: #{tpu_custom_call.1} parent=55 // pred_fallthru
          _
      $region56: #{tpu_custom_call.1} parent=5 // pred_fallthru
        _
    $region6: #{tpu_custom_call.1} parent=1 // loop_footer
      %s25 = sadd.s32 1, %s21
    $region7: #{tpu_custom_call.1} parent=1 // loop_footer_branch
      %20 = sbr.rel target = $region3
    $region8: #{tpu_custom_call.1} parent=1 // loop_exit
      _
    %1403 = vsyncpa [#allocation6], 1
    %s1404 = scalar_lea.sflag [#allocation6], 1
    %1405 = vsyncpa %s1404, 1
    %1406 = vsyncpa [#allocation9], 1
    %1407 = vsyncpa [#allocation7], 1
    %s1408 = scalar_lea.sflag [#allocation7], 1
    %1409 = vsyncpa %s1408, 1
    %1410 = vsyncpa [#allocation12], 1
    %s1411 = scalar_lea.sflag [#allocation12], 1
    %1412 = vsyncpa %s1411, 1

</llo_original>
